<compile_context>
chip_gen: v7x
topology: tpu7x:2x2x1
jax: 0.10.0
libtpu: 0.0.40
codegen_flags: <defaults>
</compile_context>

<pallas_src>
import functools

import jax
import jax.numpy as jnp
from jax import lax
from jax.experimental import pallas as pl
from jax.experimental.pallas import tpu as pltpu


# ----------------------------------------------------------------------------
# Fused kernel: GCN conv x2  ->  Set2Set (LSTM attention)  ->  3-layer MLP head
# Processes TB graphs per grid step; everything stays resident in VMEM.
# ----------------------------------------------------------------------------
def gnn_kernel(adj_ref, x_ref,
               cw1_ref, cb1_ref, cw2_ref, cb2_ref,
               wih_ref, whh_ref, lb_ref,
               mw1_ref, mb1_ref, mw2_ref, mb2_ref, mw3_ref, mb3_ref,
               out_ref):
    adj = adj_ref[...]                      # (TB, N, N)  bf16 (binary -> exact)
    x = x_ref[...]                          # (TB, N, Fin) bf16
    TB, N, _ = adj.shape
    D = cw1_ref.shape[1]

    # ---- conv layer 1: ReLU(adj @ x @ W1 + b1); contract adj against Fin (< D) first.
    ax = jnp.einsum('bij,bjf->bif', adj, x,
                    preferred_element_type=jnp.float32)              # (TB, N, Fin)
    h1 = jnp.einsum('bnf,fd->bnd', ax.astype(jnp.bfloat16), cw1_ref[...],
                    preferred_element_type=jnp.float32) + cb1_ref[...]
    h1 = jnp.maximum(h1, 0.0).astype(jnp.bfloat16)                   # (TB, N, D)
    # F.dropout(..., training=False) -> identity in eval mode

    # ---- conv layer 2 (fixed middle conv, applied once): ReLU(adj @ (h1 @ W2) + b2)
    hw = jnp.einsum('bnd,de->bne', h1, cw2_ref[...],
                    preferred_element_type=jnp.float32)
    h2 = jnp.einsum('bij,bje->bie', adj, hw.astype(jnp.bfloat16),
                    preferred_element_type=jnp.float32) + cb2_ref[...]
    xg = jnp.maximum(h2, 0.0)                                        # (TB, N, D) f32

    # ---- Set2Set readout: n_steps = N LSTM-attention iterations, batched over TB.
    wih = wih_ref[...]                      # (4, 2D, D)  per-gate (i, f, g, o)
    whh = whh_ref[...]                      # (4, D, D)
    lb = lb_ref[...]                        # (4, 1, D)   (b_ih + b_hh)

    def lstm_gate(k, q_star, h):
        return (jnp.dot(q_star, wih[k], preferred_element_type=jnp.float32)
                + jnp.dot(h, whh[k], preferred_element_type=jnp.float32)
                + lb[k])

    def step(_, carry):
        h, c, q_star = carry                                  # (TB,D),(TB,D),(TB,2D)
        i_g = jax.nn.sigmoid(lstm_gate(0, q_star, h))
        f_g = jax.nn.sigmoid(lstm_gate(1, q_star, h))
        g_g = jnp.tanh(lstm_gate(2, q_star, h))
        o_g = jax.nn.sigmoid(lstm_gate(3, q_star, h))
        c_new = f_g * c + i_g * g_g
        q = o_g * jnp.tanh(c_new)                             # (TB, D)

        # attention over nodes (per graph)
        e = jnp.sum(xg * q[:, None, :], axis=-1)              # (TB, N)
        e_max = jnp.max(e, axis=-1, keepdims=True)            # (TB, 1)
        p = jnp.exp(e - e_max)                                # (TB, N)
        denom = jnp.sum(p, axis=-1, keepdims=True)            # (TB, 1)
        a = p * pl.reciprocal(denom, approx=True)             # softmax over nodes
        r = jnp.sum(a[:, :, None] * xg, axis=1)               # (TB, D)

        q_star_new = jnp.concatenate([q, r], axis=-1)         # (TB, 2D)
        return q, c_new, q_star_new

    h0 = jnp.zeros((TB, D), jnp.float32)
    c0 = jnp.zeros((TB, D), jnp.float32)
    qs0 = jnp.zeros((TB, 2 * D), jnp.float32)
    _, _, q_star = lax.fori_loop(0, N, step, (h0, c0, qs0))

    # ---- MLP head (BatchNorm already folded into mw2/mb2 and mw3/mb3):
    #   FC(2D->D)+ReLU -> FC(D->D)+ReLU -> FC(D->graph_out)+LeakyReLU(0.01)
    m = jnp.dot(q_star, mw1_ref[...], preferred_element_type=jnp.float32) + mb1_ref[...]
    m = jnp.maximum(m, 0.0)
    m = jnp.dot(m, mw2_ref[...], preferred_element_type=jnp.float32) + mb2_ref[...]
    m = jnp.maximum(m, 0.0)
    m = jnp.dot(m, mw3_ref[...], preferred_element_type=jnp.float32) + mb3_ref[...]
    out_ref[...] = jnp.where(m >= 0.0, m, 0.01 * m)            # LeakyReLU, slope 0.01


@functools.partial(jax.jit, static_argnames=("tb",))
def gnn_forward(x, adj, params, tb=None):
    B, N, Fin = x.shape
    D = params["conv_w1"].shape[1]
    G = params["w3f"].shape[1]
    if tb is None:
        tb = B
    assert B % tb == 0, (B, tb)

    adj_b = adj.astype(jnp.bfloat16)
    x_b = x.astype(jnp.bfloat16)

    return pl.pallas_call(
        gnn_kernel,
        out_shape=jax.ShapeDtypeStruct((B, G), jnp.float32),
        grid=(B // tb,),
        in_specs=[
            pl.BlockSpec((tb, N, N), lambda i: (i, 0, 0)),        # adj
            pl.BlockSpec((tb, N, Fin), lambda i: (i, 0, 0)),      # x
            pl.BlockSpec((Fin, D), lambda i: (0, 0)),             # conv w1
            pl.BlockSpec((1, D), lambda i: (0, 0)),               # conv b1
            pl.BlockSpec((D, D), lambda i: (0, 0)),               # conv w2
            pl.BlockSpec((1, D), lambda i: (0, 0)),               # conv b2
            pl.BlockSpec((4, 2 * D, D), lambda i: (0, 0, 0)),     # lstm w_ih (per-gate)
            pl.BlockSpec((4, D, D), lambda i: (0, 0, 0)),         # lstm w_hh (per-gate)
            pl.BlockSpec((4, 1, D), lambda i: (0, 0, 0)),         # lstm bias (per-gate)
            pl.BlockSpec((2 * D, D), lambda i: (0, 0)),           # mlp w1
            pl.BlockSpec((1, D), lambda i: (0, 0)),               # mlp b1
            pl.BlockSpec((D, D), lambda i: (0, 0)),               # mlp w2 (BN folded)
            pl.BlockSpec((1, D), lambda i: (0, 0)),               # mlp b2 (BN folded)
            pl.BlockSpec((D, G), lambda i: (0, 0)),               # mlp w3 (BN folded)
            pl.BlockSpec((1, G), lambda i: (0, 0)),               # mlp b3 (BN folded)
        ],
        out_specs=pl.BlockSpec((tb, G), lambda i: (i, 0)),
        compiler_params=pltpu.CompilerParams(dimension_semantics=("parallel",)),
    )(adj_b, x_b,
      params["conv_w1"], params["conv_b1"], params["conv_w2"], params["conv_b2"],
      params["lstm_wih"], params["lstm_whh"], params["lstm_b"],
      params["w1"], params["b1"], params["w2f"], params["b2f"],
      params["w3f"], params["b3f"])


# ----------------------------------------------------------------------------
# Parameter construction (PyTorch-style layout) + kernel-layout preparation.
# ----------------------------------------------------------------------------
def make_params(key, nfeat, nhid, graph_out):
    ks = jax.random.split(key, 12)
    scale = 0.1
    D = nhid
    return {
        # conv layers (GCN-style): y = ReLU(adj @ (x @ W) + b)
        "conv_w1": scale * jax.random.normal(ks[0], (nfeat, D), jnp.float32),
        "conv_b1": jnp.zeros((1, D), jnp.float32),
        "conv_w2": scale * jax.random.normal(ks[1], (D, D), jnp.float32),
        "conv_b2": jnp.zeros((1, D), jnp.float32),
        # Set2Set LSTMCell(input 2D -> hidden D), PyTorch layout (4D, in), gates i,f,g,o
        "lstm_w_ih": scale * jax.random.normal(ks[2], (4 * D, 2 * D), jnp.float32),
        "lstm_w_hh": scale * jax.random.normal(ks[3], (4 * D, D), jnp.float32),
        "lstm_b_ih": scale * jax.random.normal(ks[4], (4 * D,), jnp.float32),
        "lstm_b_hh": scale * jax.random.normal(ks[5], (4 * D,), jnp.float32),
        # MLP head 2D -> D -> D -> graph_out, BatchNorm1d (eval) after first two ReLUs
        "w1": scale * jax.random.normal(ks[6], (2 * D, D), jnp.float32),
        "b1": jnp.zeros((1, D), jnp.float32),
        "bn1_gamma": jnp.ones((D,), jnp.float32), "bn1_beta": jnp.zeros((D,), jnp.float32),
        "bn1_mean": jnp.zeros((D,), jnp.float32), "bn1_var": jnp.ones((D,), jnp.float32),
        "w2": scale * jax.random.normal(ks[7], (D, D), jnp.float32),
        "b2": jnp.zeros((1, D), jnp.float32),
        "bn2_gamma": jnp.ones((D,), jnp.float32), "bn2_beta": jnp.zeros((D,), jnp.float32),
        "bn2_mean": jnp.zeros((D,), jnp.float32), "bn2_var": jnp.ones((D,), jnp.float32),
        "w3": scale * jax.random.normal(ks[8], (D, graph_out), jnp.float32),
        "b3": jnp.zeros((1, graph_out), jnp.float32),
    }


def prepare_params(raw, eps=1e-5):
    """Convert PyTorch-style parameters to the fused-kernel layout."""
    D = raw["conv_w1"].shape[1]
    # --- per-gate stacked, pre-transposed LSTM weights (gate order i, f, g, o) ---
    wih = raw["lstm_w_ih"].reshape(4, D, 2 * D)
    whh = raw["lstm_w_hh"].reshape(4, D, D)
    lstm_b = (raw["lstm_b_ih"] + raw["lstm_b_hh"]).reshape(4, 1, D)
    wih_t = jnp.transpose(wih, (0, 2, 1))                 # (4, 2D, D)
    whh_t = jnp.transpose(whh, (0, 2, 1))                 # (4, D, D)
    # --- fold eval-mode BatchNorm (y = a*s + t, applied after ReLU) into next FC ---
    s1 = raw["bn1_gamma"] / jnp.sqrt(raw["bn1_var"] + eps)
    t1 = raw["bn1_beta"] - raw["bn1_mean"] * s1
    s2 = raw["bn2_gamma"] / jnp.sqrt(raw["bn2_var"] + eps)
    t2 = raw["bn2_beta"] - raw["bn2_mean"] * s2
    w2f = s1[:, None] * raw["w2"]
    b2f = raw["b2"] + t1[None, :] @ raw["w2"]
    w3f = s2[:, None] * raw["w3"]
    b3f = raw["b3"] + t2[None, :] @ raw["w3"]
    return {
        "conv_w1": raw["conv_w1"].astype(jnp.bfloat16),
        "conv_b1": raw["conv_b1"],
        "conv_w2": raw["conv_w2"].astype(jnp.bfloat16),
        "conv_b2": raw["conv_b2"],
        "lstm_wih": wih_t, "lstm_whh": whh_t, "lstm_b": lstm_b,
        "w1": raw["w1"], "b1": raw["b1"],
        "w2f": w2f, "b2f": b2f,
        "w3f": w3f, "b3f": b3f,
    }


if __name__ == "__main__":
    B, N = 2, 8          # batch of graphs, nodes per graph
    nfeat, nhid = 16, 32
    graph_out = 4

    key = jax.random.PRNGKey(0)
    kx, ka, kp = jax.random.split(key, 3)

    x = jax.random.normal(kx, (B, N, nfeat), jnp.float32)
    # symmetric binary adjacency with self-loops
    a = (jax.random.uniform(ka, (B, N, N)) > 0.5).astype(jnp.float32)
    adj = jnp.clip(a + jnp.transpose(a, (0, 2, 1)) + jnp.eye(N)[None], 0.0, 1.0)

    raw_params = make_params(kp, nfeat, nhid, graph_out)
    params = prepare_params(raw_params)

    out = gnn_forward(x, adj, params, tb=B)
    out = jax.block_until_ready(out)
    assert out.shape == (B, graph_out), out.shape
    assert bool(jnp.all(jnp.isfinite(out)))
    print("KERNEL_OK")
</pallas_src>

<mosaic_0001>
module attributes {stable_mosaic.version = 11 : i64} {
  func.func @gnn_kernel(%arg0: i32, %arg1: memref<2x8x8xbf16, #tpu.memory_space<vmem>>, %arg2: memref<2x8x16xbf16, #tpu.memory_space<vmem>>, %arg3: memref<16x32xbf16, #tpu.memory_space<vmem>>, %arg4: memref<1x32xf32, #tpu.memory_space<vmem>>, %arg5: memref<32x32xbf16, #tpu.memory_space<vmem>>, %arg6: memref<1x32xf32, #tpu.memory_space<vmem>>, %arg7: memref<4x64x32xf32, #tpu.memory_space<vmem>>, %arg8: memref<4x32x32xf32, #tpu.memory_space<vmem>>, %arg9: memref<4x1x32xf32, #tpu.memory_space<vmem>>, %arg10: memref<64x32xf32, #tpu.memory_space<vmem>>, %arg11: memref<1x32xf32, #tpu.memory_space<vmem>>, %arg12: memref<32x32xf32, #tpu.memory_space<vmem>>, %arg13: memref<1x32xf32, #tpu.memory_space<vmem>>, %arg14: memref<32x4xf32, #tpu.memory_space<vmem>>, %arg15: memref<1x4xf32, #tpu.memory_space<vmem>>, %arg16: memref<2x4xf32, #tpu.memory_space<vmem>>) attributes {dimension_semantics = [#tpu.dimension_semantics<parallel>], iteration_bounds = array<i64: 1>, scalar_prefetch = 0 : i64, scratch_operands = 0 : i64, tpu.core_type = #tpu.core_type<tc>, window_params = [{transform_indices = @transform_0, window_bounds = array<i64: 2, 8, 8>}, {transform_indices = @transform_1, window_bounds = array<i64: 2, 8, 16>}, {pipeline_mode = #tpu.pipeline_mode<synchronous>, transform_indices = @transform_2, window_bounds = array<i64: 16, 32>}, {pipeline_mode = #tpu.pipeline_mode<synchronous>, transform_indices = @transform_3, window_bounds = array<i64: 1, 32>}, {pipeline_mode = #tpu.pipeline_mode<synchronous>, transform_indices = @transform_4, window_bounds = array<i64: 32, 32>}, {pipeline_mode = #tpu.pipeline_mode<synchronous>, transform_indices = @transform_5, window_bounds = array<i64: 1, 32>}, {pipeline_mode = #tpu.pipeline_mode<synchronous>, transform_indices = @transform_6, window_bounds = array<i64: 4, 64, 32>}, {pipeline_mode = #tpu.pipeline_mode<synchronous>, transform_indices = @transform_7, window_bounds = array<i64: 4, 32, 32>}, {pipeline_mode = #tpu.pipeline_mode<synchronous>, transform_indices = @transform_8, window_bounds = array<i64: 4, 1, 32>}, {pipeline_mode = #tpu.pipeline_mode<synchronous>, transform_indices = @transform_9, window_bounds = array<i64: 64, 32>}, {pipeline_mode = #tpu.pipeline_mode<synchronous>, transform_indices = @transform_10, window_bounds = array<i64: 1, 32>}, {pipeline_mode = #tpu.pipeline_mode<synchronous>, transform_indices = @transform_11, window_bounds = array<i64: 32, 32>}, {pipeline_mode = #tpu.pipeline_mode<synchronous>, transform_indices = @transform_12, window_bounds = array<i64: 1, 32>}, {pipeline_mode = #tpu.pipeline_mode<synchronous>, transform_indices = @transform_13, window_bounds = array<i64: 32, 4>}, {pipeline_mode = #tpu.pipeline_mode<synchronous>, transform_indices = @transform_14, window_bounds = array<i64: 1, 4>}, {transform_indices = @transform_15, window_bounds = array<i64: 2, 4>}]} {
    %c0 = arith.constant 0 : index
    %c0_0 = arith.constant 0 : index
    %c0_1 = arith.constant 0 : index
    %0 = vector.load %arg1[%c0, %c0_0, %c0_1] : memref<2x8x8xbf16, #tpu.memory_space<vmem>>, vector<2x8x8xbf16>
    %c0_2 = arith.constant 0 : index
    %c0_3 = arith.constant 0 : index
    %c0_4 = arith.constant 0 : index
    %1 = vector.load %arg2[%c0_2, %c0_3, %c0_4] : memref<2x8x16xbf16, #tpu.memory_space<vmem>>, vector<2x8x16xbf16>
    "tpu.trace_start"() <{level = 10 : i32, message = "bij,bjf->bif"}> : () -> ()
    %cst = arith.constant dense<0.000000e+00> : vector<2x8x16xf32>
    %2 = tpu.matmul %0, %1, %cst {dimension_numbers = #tpu.dot_dimension_numbers<[2], [1], [1], [2], [0, 0, 0, 1, 1, 2], [0], [0]>} : vector<2x8x8xbf16>, vector<2x8x16xbf16>, vector<2x8x16xf32> -> vector<2x8x16xf32>
    "tpu.trace_stop"() : () -> ()
    %3 = arith.truncf %2 : vector<2x8x16xf32> to vector<2x8x16xbf16>
    %c0_5 = arith.constant 0 : index
    %c0_6 = arith.constant 0 : index
    %4 = vector.load %arg3[%c0_5, %c0_6] : memref<16x32xbf16, #tpu.memory_space<vmem>>, vector<16x32xbf16>
    "tpu.trace_start"() <{level = 10 : i32, message = "bnf,fd->bnd"}> : () -> ()
    %cst_7 = arith.constant dense<0.000000e+00> : vector<2x8x32xf32>
    %5 = tpu.matmul %3, %4, %cst_7 {dimension_numbers = #tpu.dot_dimension_numbers<[2], [0], [0, 1], [1], [0, 0, 0, 1, 1, 1], [], []>} : vector<2x8x16xbf16>, vector<16x32xbf16>, vector<2x8x32xf32> -> vector<2x8x32xf32>
    "tpu.trace_stop"() : () -> ()
    %c0_8 = arith.constant 0 : index
    %c0_9 = arith.constant 0 : index
    %6 = vector.load %arg4[%c0_8, %c0_9] : memref<1x32xf32, #tpu.memory_space<vmem>>, vector<1x32xf32>
    %7 = vector.shape_cast %6 : vector<1x32xf32> to vector<1x1x32xf32>
    %8 = vector.broadcast %7 : vector<1x1x32xf32> to vector<2x8x32xf32>
    %9 = arith.addf %5, %8 : vector<2x8x32xf32>
    %cst_10 = arith.constant 0.000000e+00 : f32
    %10 = vector.broadcast %cst_10 : f32 to vector<2x8x32xf32>
    %11 = arith.maximumf %9, %10 : vector<2x8x32xf32>
    %12 = arith.truncf %11 : vector<2x8x32xf32> to vector<2x8x32xbf16>
    %c0_11 = arith.constant 0 : index
    %c0_12 = arith.constant 0 : index
    %13 = vector.load %arg5[%c0_11, %c0_12] : memref<32x32xbf16, #tpu.memory_space<vmem>>, vector<32x32xbf16>
    "tpu.trace_start"() <{level = 10 : i32, message = "bnd,de->bne"}> : () -> ()
    %cst_13 = arith.constant dense<0.000000e+00> : vector<2x8x32xf32>
    %14 = tpu.matmul %12, %13, %cst_13 {dimension_numbers = #tpu.dot_dimension_numbers<[2], [0], [0, 1], [1], [0, 0, 0, 1, 1, 1], [], []>} : vector<2x8x32xbf16>, vector<32x32xbf16>, vector<2x8x32xf32> -> vector<2x8x32xf32>
    "tpu.trace_stop"() : () -> ()
    %15 = arith.truncf %14 : vector<2x8x32xf32> to vector<2x8x32xbf16>
    "tpu.trace_start"() <{level = 10 : i32, message = "bij,bje->bie"}> : () -> ()
    %cst_14 = arith.constant dense<0.000000e+00> : vector<2x8x32xf32>
    %16 = tpu.matmul %0, %15, %cst_14 {dimension_numbers = #tpu.dot_dimension_numbers<[2], [1], [1], [2], [0, 0, 0, 1, 1, 2], [0], [0]>} : vector<2x8x8xbf16>, vector<2x8x32xbf16>, vector<2x8x32xf32> -> vector<2x8x32xf32>
    "tpu.trace_stop"() : () -> ()
    %c0_15 = arith.constant 0 : index
    %c0_16 = arith.constant 0 : index
    %17 = vector.load %arg6[%c0_15, %c0_16] : memref<1x32xf32, #tpu.memory_space<vmem>>, vector<1x32xf32>
    %18 = vector.shape_cast %17 : vector<1x32xf32> to vector<1x1x32xf32>
    %19 = vector.broadcast %18 : vector<1x1x32xf32> to vector<2x8x32xf32>
    %20 = arith.addf %16, %19 : vector<2x8x32xf32>
    %cst_17 = arith.constant 0.000000e+00 : f32
    %21 = vector.broadcast %cst_17 : f32 to vector<2x8x32xf32>
    %22 = arith.maximumf %20, %21 : vector<2x8x32xf32>
    %c0_18 = arith.constant 0 : index
    %c0_19 = arith.constant 0 : index
    %c0_20 = arith.constant 0 : index
    %23 = vector.load %arg7[%c0_18, %c0_19, %c0_20] : memref<4x64x32xf32, #tpu.memory_space<vmem>>, vector<4x64x32xf32>
    %c0_21 = arith.constant 0 : index
    %c0_22 = arith.constant 0 : index
    %c0_23 = arith.constant 0 : index
    %24 = vector.load %arg8[%c0_21, %c0_22, %c0_23] : memref<4x32x32xf32, #tpu.memory_space<vmem>>, vector<4x32x32xf32>
    %c0_24 = arith.constant 0 : index
    %c0_25 = arith.constant 0 : index
    %c0_26 = arith.constant 0 : index
    %25 = vector.load %arg9[%c0_24, %c0_25, %c0_26] : memref<4x1x32xf32, #tpu.memory_space<vmem>>, vector<4x1x32xf32>
    %cst_27 = arith.constant 0.000000e+00 : f32
    %26 = vector.broadcast %cst_27 : f32 to vector<2x32xf32>
    %cst_28 = arith.constant 0.000000e+00 : f32
    %27 = vector.broadcast %cst_28 : f32 to vector<2x32xf32>
    %cst_29 = arith.constant 0.000000e+00 : f32
    %28 = vector.broadcast %cst_29 : f32 to vector<2x64xf32>
    %c0_i32 = arith.constant 0 : i32
    %c8_i32 = arith.constant 8 : i32
    %29 = arith.addi %c0_i32, %c8_i32 : i32
    %c1_i32 = arith.constant 1 : i32
    %30:3 = scf.for %arg17 = %c0_i32 to %29 step %c1_i32 iter_args(%arg18 = %26, %arg19 = %27, %arg20 = %28) -> (vector<2x32xf32>, vector<2x32xf32>, vector<2x64xf32>)  : i32 {
      %56 = vector.extract_strided_slice %23 {offsets = [0, 0, 0], sizes = [1, 64, 32], strides = [1, 1, 1]} : vector<4x64x32xf32> to vector<1x64x32xf32>
      %57 = vector.shape_cast %56 : vector<1x64x32xf32> to vector<64x32xf32>
      %cst_51 = arith.constant dense<0.000000e+00> : vector<2x32xf32>
      %58 = tpu.matmul %arg20, %57, %cst_51 {dimension_numbers = #tpu.dot_dimension_numbers<[1], [0], [0], [1], [0, 0, 1, 1], [], []>} : vector<2x64xf32>, vector<64x32xf32>, vector<2x32xf32> -> vector<2x32xf32>
      %59 = vector.extract_strided_slice %24 {offsets = [0, 0, 0], sizes = [1, 32, 32], strides = [1, 1, 1]} : vector<4x32x32xf32> to vector<1x32x32xf32>
      %60 = vector.shape_cast %59 : vector<1x32x32xf32> to vector<32x32xf32>
      %cst_52 = arith.constant dense<0.000000e+00> : vector<2x32xf32>
      %61 = tpu.matmul %arg18, %60, %cst_52 {dimension_numbers = #tpu.dot_dimension_numbers<[1], [0], [0], [1], [0, 0, 1, 1], [], []>} : vector<2x32xf32>, vector<32x32xf32>, vector<2x32xf32> -> vector<2x32xf32>
      %62 = arith.addf %58, %61 : vector<2x32xf32>
      %63 = vector.extract_strided_slice %25 {offsets = [0, 0, 0], sizes = [1, 1, 32], strides = [1, 1, 1]} : vector<4x1x32xf32> to vector<1x1x32xf32>
      %64 = vector.shape_cast %63 : vector<1x1x32xf32> to vector<1x32xf32>
      %65 = vector.broadcast %64 : vector<1x32xf32> to vector<2x32xf32>
      %66 = arith.addf %62, %65 : vector<2x32xf32>
      %67 = arith.negf %66 : vector<2x32xf32>
      %68 = math.exp %67 : vector<2x32xf32>
      %cst_53 = arith.constant 1.000000e+00 : f32
      %69 = vector.broadcast %cst_53 : f32 to vector<2x32xf32>
      %70 = arith.addf %69, %68 : vector<2x32xf32>
      %71 = arith.divf %69, %70 : vector<2x32xf32>
      %72 = vector.extract_strided_slice %23 {offsets = [1, 0, 0], sizes = [1, 64, 32], strides = [1, 1, 1]} : vector<4x64x32xf32> to vector<1x64x32xf32>
      %73 = vector.shape_cast %72 : vector<1x64x32xf32> to vector<64x32xf32>
      %cst_54 = arith.constant dense<0.000000e+00> : vector<2x32xf32>
      %74 = tpu.matmul %arg20, %73, %cst_54 {dimension_numbers = #tpu.dot_dimension_numbers<[1], [0], [0], [1], [0, 0, 1, 1], [], []>} : vector<2x64xf32>, vector<64x32xf32>, vector<2x32xf32> -> vector<2x32xf32>
      %75 = vector.extract_strided_slice %24 {offsets = [1, 0, 0], sizes = [1, 32, 32], strides = [1, 1, 1]} : vector<4x32x32xf32> to vector<1x32x32xf32>
      %76 = vector.shape_cast %75 : vector<1x32x32xf32> to vector<32x32xf32>
      %cst_55 = arith.constant dense<0.000000e+00> : vector<2x32xf32>
      %77 = tpu.matmul %arg18, %76, %cst_55 {dimension_numbers = #tpu.dot_dimension_numbers<[1], [0], [0], [1], [0, 0, 1, 1], [], []>} : vector<2x32xf32>, vector<32x32xf32>, vector<2x32xf32> -> vector<2x32xf32>
      %78 = arith.addf %74, %77 : vector<2x32xf32>
      %79 = vector.extract_strided_slice %25 {offsets = [1, 0, 0], sizes = [1, 1, 32], strides = [1, 1, 1]} : vector<4x1x32xf32> to vector<1x1x32xf32>
      %80 = vector.shape_cast %79 : vector<1x1x32xf32> to vector<1x32xf32>
      %81 = vector.broadcast %80 : vector<1x32xf32> to vector<2x32xf32>
      %82 = arith.addf %78, %81 : vector<2x32xf32>
      %83 = arith.negf %82 : vector<2x32xf32>
      %84 = math.exp %83 : vector<2x32xf32>
      %cst_56 = arith.constant 1.000000e+00 : f32
      %85 = vector.broadcast %cst_56 : f32 to vector<2x32xf32>
      %86 = arith.addf %85, %84 : vector<2x32xf32>
      %87 = arith.divf %85, %86 : vector<2x32xf32>
      %88 = vector.extract_strided_slice %23 {offsets = [2, 0, 0], sizes = [1, 64, 32], strides = [1, 1, 1]} : vector<4x64x32xf32> to vector<1x64x32xf32>
      %89 = vector.shape_cast %88 : vector<1x64x32xf32> to vector<64x32xf32>
      %cst_57 = arith.constant dense<0.000000e+00> : vector<2x32xf32>
      %90 = tpu.matmul %arg20, %89, %cst_57 {dimension_numbers = #tpu.dot_dimension_numbers<[1], [0], [0], [1], [0, 0, 1, 1], [], []>} : vector<2x64xf32>, vector<64x32xf32>, vector<2x32xf32> -> vector<2x32xf32>
      %91 = vector.extract_strided_slice %24 {offsets = [2, 0, 0], sizes = [1, 32, 32], strides = [1, 1, 1]} : vector<4x32x32xf32> to vector<1x32x32xf32>
      %92 = vector.shape_cast %91 : vector<1x32x32xf32> to vector<32x32xf32>
      %cst_58 = arith.constant dense<0.000000e+00> : vector<2x32xf32>
      %93 = tpu.matmul %arg18, %92, %cst_58 {dimension_numbers = #tpu.dot_dimension_numbers<[1], [0], [0], [1], [0, 0, 1, 1], [], []>} : vector<2x32xf32>, vector<32x32xf32>, vector<2x32xf32> -> vector<2x32xf32>
      %94 = arith.addf %90, %93 : vector<2x32xf32>
      %95 = vector.extract_strided_slice %25 {offsets = [2, 0, 0], sizes = [1, 1, 32], strides = [1, 1, 1]} : vector<4x1x32xf32> to vector<1x1x32xf32>
      %96 = vector.shape_cast %95 : vector<1x1x32xf32> to vector<1x32xf32>
      %97 = vector.broadcast %96 : vector<1x32xf32> to vector<2x32xf32>
      %98 = arith.addf %94, %97 : vector<2x32xf32>
      %99 = math.tanh %98 : vector<2x32xf32>
      %100 = vector.extract_strided_slice %23 {offsets = [3, 0, 0], sizes = [1, 64, 32], strides = [1, 1, 1]} : vector<4x64x32xf32> to vector<1x64x32xf32>
      %101 = vector.shape_cast %100 : vector<1x64x32xf32> to vector<64x32xf32>
      %cst_59 = arith.constant dense<0.000000e+00> : vector<2x32xf32>
      %102 = tpu.matmul %arg20, %101, %cst_59 {dimension_numbers = #tpu.dot_dimension_numbers<[1], [0], [0], [1], [0, 0, 1, 1], [], []>} : vector<2x64xf32>, vector<64x32xf32>, vector<2x32xf32> -> vector<2x32xf32>
      %103 = vector.extract_strided_slice %24 {offsets = [3, 0, 0], sizes = [1, 32, 32], strides = [1, 1, 1]} : vector<4x32x32xf32> to vector<1x32x32xf32>
      %104 = vector.shape_cast %103 : vector<1x32x32xf32> to vector<32x32xf32>
      %cst_60 = arith.constant dense<0.000000e+00> : vector<2x32xf32>
      %105 = tpu.matmul %arg18, %104, %cst_60 {dimension_numbers = #tpu.dot_dimension_numbers<[1], [0], [0], [1], [0, 0, 1, 1], [], []>} : vector<2x32xf32>, vector<32x32xf32>, vector<2x32xf32> -> vector<2x32xf32>
      %106 = arith.addf %102, %105 : vector<2x32xf32>
      %107 = vector.extract_strided_slice %25 {offsets = [3, 0, 0], sizes = [1, 1, 32], strides = [1, 1, 1]} : vector<4x1x32xf32> to vector<1x1x32xf32>
      %108 = vector.shape_cast %107 : vector<1x1x32xf32> to vector<1x32xf32>
      %109 = vector.broadcast %108 : vector<1x32xf32> to vector<2x32xf32>
      %110 = arith.addf %106, %109 : vector<2x32xf32>
      %111 = arith.negf %110 : vector<2x32xf32>
      %112 = math.exp %111 : vector<2x32xf32>
      %cst_61 = arith.constant 1.000000e+00 : f32
      %113 = vector.broadcast %cst_61 : f32 to vector<2x32xf32>
      %114 = arith.addf %113, %112 : vector<2x32xf32>
      %115 = arith.divf %113, %114 : vector<2x32xf32>
      %116 = arith.mulf %87, %arg19 : vector<2x32xf32>
      %117 = arith.mulf %71, %99 : vector<2x32xf32>
      %118 = arith.addf %116, %117 : vector<2x32xf32>
      %119 = math.tanh %118 : vector<2x32xf32>
      %120 = arith.mulf %115, %119 : vector<2x32xf32>
      %121 = vector.shape_cast %120 : vector<2x32xf32> to vector<2x1x32xf32>
      %122 = vector.broadcast %121 : vector<2x1x32xf32> to vector<2x8x32xf32>
      %123 = arith.mulf %22, %122 : vector<2x8x32xf32>
      %cst_62 = arith.constant dense<0.000000e+00> : vector<2x8xf32>
      %124 = vector.multi_reduction <add>, %123, %cst_62 [2] : vector<2x8x32xf32> to vector<2x8xf32>
      %cst_63 = arith.constant dense<0xFF800000> : vector<2xf32>
      %125 = vector.multi_reduction <maximumf>, %124, %cst_63 [1] : vector<2x8xf32> to vector<2xf32>
      %126 = vector.shape_cast %125 : vector<2xf32> to vector<2x1xf32>
      %127 = vector.broadcast %126 : vector<2x1xf32> to vector<2x8xf32>
      %128 = arith.subf %124, %127 : vector<2x8xf32>
      %129 = math.exp %128 : vector<2x8xf32>
      %cst_64 = arith.constant dense<0.000000e+00> : vector<2xf32>
      %130 = vector.multi_reduction <add>, %129, %cst_64 [1] : vector<2x8xf32> to vector<2xf32>
      %131 = vector.shape_cast %130 : vector<2xf32> to vector<2x1xf32>
      %132 = tpu.reciprocal %131 {approx = true} : vector<2x1xf32> -> vector<2x1xf32>
      %133 = vector.broadcast %132 : vector<2x1xf32> to vector<2x8xf32>
      %134 = arith.mulf %129, %133 : vector<2x8xf32>
      %135 = vector.shape_cast %134 : vector<2x8xf32> to vector<2x8x1xf32>
      %136 = vector.broadcast %135 : vector<2x8x1xf32> to vector<2x8x32xf32>
      %137 = arith.mulf %136, %22 : vector<2x8x32xf32>
      %cst_65 = arith.constant dense<0.000000e+00> : vector<2x32xf32>
      %138 = vector.multi_reduction <add>, %137, %cst_65 [1] : vector<2x8x32xf32> to vector<2x32xf32>
      %139 = tpu.concatenate %120, %138 in 1 : vector<2x32xf32>, vector<2x32xf32> -> vector<2x64xf32>
      scf.yield %120, %118, %139 : vector<2x32xf32>, vector<2x32xf32>, vector<2x64xf32>
    }
    %c0_30 = arith.constant 0 : index
    %c0_31 = arith.constant 0 : index
    %31 = vector.load %arg10[%c0_30, %c0_31] : memref<64x32xf32, #tpu.memory_space<vmem>>, vector<64x32xf32>
    %cst_32 = arith.constant dense<0.000000e+00> : vector<2x32xf32>
    %32 = tpu.matmul %30#2, %31, %cst_32 {dimension_numbers = #tpu.dot_dimension_numbers<[1], [0], [0], [1], [0, 0, 1, 1], [], []>} : vector<2x64xf32>, vector<64x32xf32>, vector<2x32xf32> -> vector<2x32xf32>
    %c0_33 = arith.constant 0 : index
    %c0_34 = arith.constant 0 : index
    %33 = vector.load %arg11[%c0_33, %c0_34] : memref<1x32xf32, #tpu.memory_space<vmem>>, vector<1x32xf32>
    %34 = vector.broadcast %33 : vector<1x32xf32> to vector<2x32xf32>
    %35 = arith.addf %32, %34 : vector<2x32xf32>
    %cst_35 = arith.constant 0.000000e+00 : f32
    %36 = vector.broadcast %cst_35 : f32 to vector<2x32xf32>
    %37 = arith.maximumf %35, %36 : vector<2x32xf32>
    %c0_36 = arith.constant 0 : index
    %c0_37 = arith.constant 0 : index
    %38 = vector.load %arg12[%c0_36, %c0_37] : memref<32x32xf32, #tpu.memory_space<vmem>>, vector<32x32xf32>
    %cst_38 = arith.constant dense<0.000000e+00> : vector<2x32xf32>
    %39 = tpu.matmul %37, %38, %cst_38 {dimension_numbers = #tpu.dot_dimension_numbers<[1], [0], [0], [1], [0, 0, 1, 1], [], []>} : vector<2x32xf32>, vector<32x32xf32>, vector<2x32xf32> -> vector<2x32xf32>
    %c0_39 = arith.constant 0 : index
    %c0_40 = arith.constant 0 : index
    %40 = vector.load %arg13[%c0_39, %c0_40] : memref<1x32xf32, #tpu.memory_space<vmem>>, vector<1x32xf32>
    %41 = vector.broadcast %40 : vector<1x32xf32> to vector<2x32xf32>
    %42 = arith.addf %39, %41 : vector<2x32xf32>
    %cst_41 = arith.constant 0.000000e+00 : f32
    %43 = vector.broadcast %cst_41 : f32 to vector<2x32xf32>
    %44 = arith.maximumf %42, %43 : vector<2x32xf32>
    %c0_42 = arith.constant 0 : index
    %c0_43 = arith.constant 0 : index
    %45 = vector.load %arg14[%c0_42, %c0_43] : memref<32x4xf32, #tpu.memory_space<vmem>>, vector<32x4xf32>
    %cst_44 = arith.constant dense<0.000000e+00> : vector<2x4xf32>
    %46 = tpu.matmul %44, %45, %cst_44 {dimension_numbers = #tpu.dot_dimension_numbers<[1], [0], [0], [1], [0, 0, 1, 1], [], []>} : vector<2x32xf32>, vector<32x4xf32>, vector<2x4xf32> -> vector<2x4xf32>
    %c0_45 = arith.constant 0 : index
    %c0_46 = arith.constant 0 : index
    %47 = vector.load %arg15[%c0_45, %c0_46] : memref<1x4xf32, #tpu.memory_space<vmem>>, vector<1x4xf32>
    %48 = vector.broadcast %47 : vector<1x4xf32> to vector<2x4xf32>
    %49 = arith.addf %46, %48 : vector<2x4xf32>
    %cst_47 = arith.constant 0.000000e+00 : f32
    %50 = vector.broadcast %cst_47 : f32 to vector<2x4xf32>
    %51 = arith.cmpf oge, %49, %50 : vector<2x4xf32>
    %cst_48 = arith.constant 0.00999999977 : f32
    %52 = vector.broadcast %cst_48 : f32 to vector<2x4xf32>
    %53 = arith.mulf %52, %49 : vector<2x4xf32>
    %54 = arith.select %51, %49, %53 : vector<2x4xi1>, vector<2x4xf32>
    %c0_49 = arith.constant 0 : index
    %c0_50 = arith.constant 0 : index
    %55 = vector.load %arg16[%c0_49, %c0_50] : memref<2x4xf32, #tpu.memory_space<vmem>>, vector<2x4xf32>
    tpu.vector_store %arg16[%c0_49, %c0_50], %54 {strides = array<i32>} : memref<2x4xf32, #tpu.memory_space<vmem>>, vector<2x4xf32>,
    return
  }
  func.func @transform_0(%arg0: i32) -> (i32, i32, i32) {
    %c0_i32 = arith.constant 0 : i32
    %c0_i32_0 = arith.constant 0 : i32
    %c0_i32_1 = arith.constant 0 : i32
    return %arg0, %c0_i32, %c0_i32_0 : i32, i32, i32
  }
  func.func @transform_1(%arg0: i32) -> (i32, i32, i32) {
    %c0_i32 = arith.constant 0 : i32
    %c0_i32_0 = arith.constant 0 : i32
    %c0_i32_1 = arith.constant 0 : i32
    return %arg0, %c0_i32, %c0_i32_0 : i32, i32, i32
  }
  func.func @transform_2(%arg0: i32) -> (i32, i32) {
    %c0_i32 = arith.constant 0 : i32
    %c0_i32_0 = arith.constant 0 : i32
    %c0_i32_1 = arith.constant 0 : i32
    return %c0_i32, %c0_i32_0 : i32, i32
  }
  func.func @transform_3(%arg0: i32) -> (i32, i32) {
    %c0_i32 = arith.constant 0 : i32
    %c0_i32_0 = arith.constant 0 : i32
    %c0_i32_1 = arith.constant 0 : i32
    return %c0_i32, %c0_i32_0 : i32, i32
  }
  func.func @transform_4(%arg0: i32) -> (i32, i32) {
    %c0_i32 = arith.constant 0 : i32
    %c0_i32_0 = arith.constant 0 : i32
    %c0_i32_1 = arith.constant 0 : i32
    return %c0_i32, %c0_i32_0 : i32, i32
  }
  func.func @transform_5(%arg0: i32) -> (i32, i32) {
    %c0_i32 = arith.constant 0 : i32
    %c0_i32_0 = arith.constant 0 : i32
    %c0_i32_1 = arith.constant 0 : i32
    return %c0_i32, %c0_i32_0 : i32, i32
  }
  func.func @transform_6(%arg0: i32) -> (i32, i32, i32) {
    %c0_i32 = arith.constant 0 : i32
    %c0_i32_0 = arith.constant 0 : i32
    %c0_i32_1 = arith.constant 0 : i32
    %c0_i32_2 = arith.constant 0 : i32
    return %c0_i32, %c0_i32_0, %c0_i32_1 : i32, i32, i32
  }
  func.func @transform_7(%arg0: i32) -> (i32, i32, i32) {
    %c0_i32 = arith.constant 0 : i32
    %c0_i32_0 = arith.constant 0 : i32
    %c0_i32_1 = arith.constant 0 : i32
    %c0_i32_2 = arith.constant 0 : i32
    return %c0_i32, %c0_i32_0, %c0_i32_1 : i32, i32, i32
  }
  func.func @transform_8(%arg0: i32) -> (i32, i32, i32) {
    %c0_i32 = arith.constant 0 : i32
    %c0_i32_0 = arith.constant 0 : i32
    %c0_i32_1 = arith.constant 0 : i32
    %c0_i32_2 = arith.constant 0 : i32
    return %c0_i32, %c0_i32_0, %c0_i32_1 : i32, i32, i32
  }
  func.func @transform_9(%arg0: i32) -> (i32, i32) {
    %c0_i32 = arith.constant 0 : i32
    %c0_i32_0 = arith.constant 0 : i32
    %c0_i32_1 = arith.constant 0 : i32
    return %c0_i32, %c0_i32_0 : i32, i32
  }
  func.func @transform_10(%arg0: i32) -> (i32, i32) {
    %c0_i32 = arith.constant 0 : i32
    %c0_i32_0 = arith.constant 0 : i32
    %c0_i32_1 = arith.constant 0 : i32
    return %c0_i32, %c0_i32_0 : i32, i32
  }
  func.func @transform_11(%arg0: i32) -> (i32, i32) {
    %c0_i32 = arith.constant 0 : i32
    %c0_i32_0 = arith.constant 0 : i32
    %c0_i32_1 = arith.constant 0 : i32
    return %c0_i32, %c0_i32_0 : i32, i32
  }
  func.func @transform_12(%arg0: i32) -> (i32, i32) {
    %c0_i32 = arith.constant 0 : i32
    %c0_i32_0 = arith.constant 0 : i32
    %c0_i32_1 = arith.constant 0 : i32
    return %c0_i32, %c0_i32_0 : i32, i32
  }
  func.func @transform_13(%arg0: i32) -> (i32, i32) {
    %c0_i32 = arith.constant 0 : i32
    %c0_i32_0 = arith.constant 0 : i32
    %c0_i32_1 = arith.constant 0 : i32
    return %c0_i32, %c0_i32_0 : i32, i32
  }
  func.func @transform_14(%arg0: i32) -> (i32, i32) {
    %c0_i32 = arith.constant 0 : i32
    %c0_i32_0 = arith.constant 0 : i32
    %c0_i32_1 = arith.constant 0 : i32
    return %c0_i32, %c0_i32_0 : i32, i32
  }
  func.func @transform_15(%arg0: i32) -> (i32, i32) {
    %c0_i32 = arith.constant 0 : i32
    %c0_i32_0 = arith.constant 0 : i32
    return %arg0, %c0_i32 : i32, i32
  }
}

</mosaic_0001>

<llo_original>
// kernel: gnn_forward.1
$region0: #{gnn_forward.1}
  #allocation0 [shape = 'u32[]', space=smem, size = 0x4, offset = 0x4, fixed_abs, tag = 'smem constant byte address 0x4 - core index']
  #allocation1 [shape = 'u32[144,128]{1,0:T(1,128)}', space=vmem, size = 0x12000, scoped, tag = 'internal scratch']
  %s0 = inlined_call_operand.vmem [shape: bf16[2,8,8], index: 0, kind: input, shape index: {}]
  %s1 = inlined_call_operand.vmem [shape: bf16[2,8,16], index: 1, kind: input, shape index: {}]
  %s2 = inlined_call_operand.vmem [shape: bf16[16,32], index: 2, kind: input, shape index: {}]
  %s3 = inlined_call_operand.vmem [shape: f32[1,32], index: 3, kind: input, shape index: {}]
  %s4 = inlined_call_operand.vmem [shape: bf16[32,32], index: 4, kind: input, shape index: {}]
  %s5 = inlined_call_operand.vmem [shape: f32[1,32], index: 5, kind: input, shape index: {}]
  %s6 = inlined_call_operand.vmem [shape: f32[4,64,32], index: 6, kind: input, shape index: {}]
  %s7 = inlined_call_operand.vmem [shape: f32[4,32,32], index: 7, kind: input, shape index: {}]
  %s8 = inlined_call_operand.vmem [shape: f32[4,1,32], index: 8, kind: input, shape index: {}]
  %s9 = inlined_call_operand.vmem [shape: f32[64,32], index: 9, kind: input, shape index: {}]
  %s10 = inlined_call_operand.vmem [shape: f32[1,32], index: 10, kind: input, shape index: {}]
  %s11 = inlined_call_operand.vmem [shape: f32[32,32], index: 11, kind: input, shape index: {}]
  %s12 = inlined_call_operand.vmem [shape: f32[1,32], index: 12, kind: input, shape index: {}]
  %s13 = inlined_call_operand.vmem [shape: f32[32,4], index: 13, kind: input, shape index: {}]
  %s14 = inlined_call_operand.vmem [shape: f32[1,4], index: 14, kind: input, shape index: {}]
  %s15 = inlined_call_operand.hbm [shape: f32[2,4], index: 15, kind: output, shape index: {}]
  %s16 = sld [smem:[#allocation0]]
  $region77: #{gnn_forward.1} parent=0
    _
  %s18 = ssub.s32 1, %s16
  %s19 = scalar_select 0, %s18, %s16
  $region1: #{gnn_forward.1} parent=0
    #allocation2 [shape = 'u8[1024]{0}', space=vmem, size = 0x400, scoped, tag = 'output window, operand 0, single buffered']
    #allocation3 [shape = 's32[1]{0}', space=sflag, size = 0x4, scoped, tag = 'scoped memory for gnn_forward.1']
    %20 = vsyncpa [#allocation3], 0
    // Predicated region
    $region2: #{gnn_forward.1} parent=1 // pred_check
      _
    $region3: #{gnn_forward.1} parent=1 // pred_check_branch
      %22 = sbr.rel (0) target = $region5
    $region4: #{gnn_forward.1} parent=1 // pred_region
      _
    $region5: #{gnn_forward.1} parent=1 // pred_fallthru
      _
    // Predicated region
    $region6: #{gnn_forward.1} parent=1 // pred_check
      _
    $region7: #{gnn_forward.1} parent=1 // pred_check_branch
      %24 = sbr.rel (0) target = $region9
    $region8: #{gnn_forward.1} parent=1 // pred_region
      _
    $region9: #{gnn_forward.1} parent=1 // pred_fallthru
      _
    // Predicated region
    $region10: #{gnn_forward.1} parent=1 // pred_check
      _
    $region11: #{gnn_forward.1} parent=1 // pred_check_branch
      %26 = sbr.rel (0) target = $region13
    $region12: #{gnn_forward.1} parent=1 // pred_region
      _
    $region13: #{gnn_forward.1} parent=1 // pred_fallthru
      _
    // Predicated region
    $region14: #{gnn_forward.1} parent=1 // pred_check
      _
    $region15: #{gnn_forward.1} parent=1 // pred_check_branch
      %28 = sbr.rel (0) target = $region17
    $region16: #{gnn_forward.1} parent=1 // pred_region
      _
    $region17: #{gnn_forward.1} parent=1 // pred_fallthru
      _
    // Predicated region
    $region18: #{gnn_forward.1} parent=1 // pred_check
      _
    $region19: #{gnn_forward.1} parent=1 // pred_check_branch
      %30 = sbr.rel (0) target = $region21
    $region20: #{gnn_forward.1} parent=1 // pred_region
      _
    $region21: #{gnn_forward.1} parent=1 // pred_fallthru
      _
    // Predicated region
    $region22: #{gnn_forward.1} parent=1 // pred_check
      _
    $region23: #{gnn_forward.1} parent=1 // pred_check_branch
      %32 = sbr.rel (0) target = $region25
    $region24: #{gnn_forward.1} parent=1 // pred_region
      _
    $region25: #{gnn_forward.1} parent=1 // pred_fallthru
      _
    // Predicated region
    $region26: #{gnn_forward.1} parent=1 // pred_check
      _
    $region27: #{gnn_forward.1} parent=1 // pred_check_branch
      %34 = sbr.rel (0) target = $region29
    $region28: #{gnn_forward.1} parent=1 // pred_region
      _
    $region29: #{gnn_forward.1} parent=1 // pred_fallthru
      _
    // Predicated region
    $region30: #{gnn_forward.1} parent=1 // pred_check
      _
    $region31: #{gnn_forward.1} parent=1 // pred_check_branch
      %36 = sbr.rel (0) target = $region33
    $region32: #{gnn_forward.1} parent=1 // pred_region
      _
    $region33: #{gnn_forward.1} parent=1 // pred_fallthru
      _
    // Predicated region
    $region34: #{gnn_forward.1} parent=1 // pred_check
      _
    $region35: #{gnn_forward.1} parent=1 // pred_check_branch
      %38 = sbr.rel (0) target = $region37
    $region36: #{gnn_forward.1} parent=1 // pred_region
      _
    $region37: #{gnn_forward.1} parent=1 // pred_fallthru
      _
    // Predicated region
    $region38: #{gnn_forward.1} parent=1 // pred_check
      _
    $region39: #{gnn_forward.1} parent=1 // pred_check_branch
      %40 = sbr.rel (0) target = $region41
    $region40: #{gnn_forward.1} parent=1 // pred_region
      _
    $region41: #{gnn_forward.1} parent=1 // pred_fallthru
      _
    // Predicated region
    $region42: #{gnn_forward.1} parent=1 // pred_check
      _
    $region43: #{gnn_forward.1} parent=1 // pred_check_branch
      %42 = sbr.rel (0) target = $region45
    $region44: #{gnn_forward.1} parent=1 // pred_region
      _
    $region45: #{gnn_forward.1} parent=1 // pred_fallthru
      _
    // Predicated region
    $region46: #{gnn_forward.1} parent=1 // pred_check
      _
    $region47: #{gnn_forward.1} parent=1 // pred_check_branch
      %44 = sbr.rel (0) target = $region49
    $region48: #{gnn_forward.1} parent=1 // pred_region
      _
    $region49: #{gnn_forward.1} parent=1 // pred_fallthru
      _
    // Predicated region
    $region50: #{gnn_forward.1} parent=1 // pred_check
      _
    $region51: #{gnn_forward.1} parent=1 // pred_check_branch
      %46 = sbr.rel (0) target = $region53
    $region52: #{gnn_forward.1} parent=1 // pred_region
      _
    $region53: #{gnn_forward.1} parent=1 // pred_fallthru
      _
    // Predicated region
    $region54: #{gnn_forward.1} parent=1 // pred_check
      _
    $region55: #{gnn_forward.1} parent=1 // pred_check_branch
      %48 = sbr.rel (0) target = $region57
    $region56: #{gnn_forward.1} parent=1 // pred_region
      _
    $region57: #{gnn_forward.1} parent=1 // pred_fallthru
      _
    // Predicated region
    $region58: #{gnn_forward.1} parent=1 // pred_check
      _
    $region59: #{gnn_forward.1} parent=1 // pred_check_branch
      %50 = sbr.rel (0) target = $region61
    $region60: #{gnn_forward.1} parent=1 // pred_region
      _
    $region61: #{gnn_forward.1} parent=1 // pred_fallthru
      _
    %v52 = vld [vmem:[%s0] sm:$0xf]
    %v53 = vld [vmem:[%s0 + $0x4] sm:$0xf]
    %v54 = vld [vmem:[%s1] sm:$0xf]
    %v55 = vld [vmem:[%s1 + $0x4] sm:$0xf]
    %vm56 = vcmask 64512
    %v58 = vsel %vm56, %v52, 0
    %vm60 = vcmask 1043456
    %v62 = vsel %vm60, %v54, 0
    %64 = vmatprep.subr.bf16.mxu0 0
    %65 = vmatpush1.bf16.msra.mxu0 %v62
    %66 = vmatprep.subr.bf16.mxu0 0
    %67 = vmatpush1.bf16.msra.mxu0 0
    %68 = vmatprep.subr.bf16.mxu0 0
    %69 = vmatpush1.bf16.msra.mxu0 0
    %70 = vmatprep.subr.bf16.mxu0 0
    %71 = vmatpush1.bf16.msra.mxu0 0
    %72 = vmatprep.subr.bf16.mxu0 0
    %73 = vmatpush1.bf16.msra.mxu0 0
    %74 = vmatprep.subr.bf16.mxu0 0
    %75 = vmatpush1.bf16.msra.mxu0 0
    %76 = vmatprep.subr.bf16.mxu0 0
    %77 = vmatpush1.bf16.msra.mxu0 0
    %78 = vmatprep.subr.bf16.mxu0 0
    %79 = vmatpush1.bf16.msra.mxu0 0
    %80 = vmatprep.subr.bf16.mxu0 0
    %81 = vmatpush1.bf16.msra.mxu0 0
    %82 = vmatprep.subr.bf16.mxu0 0
    %83 = vmatpush1.bf16.msra.mxu0 0
    %84 = vmatprep.subr.bf16.mxu0 0
    %85 = vmatpush1.bf16.msra.mxu0 0
    %86 = vmatprep.subr.bf16.mxu0 0
    %87 = vmatpush1.bf16.msra.mxu0 0
    %88 = vmatprep.subr.bf16.mxu0 0
    %89 = vmatpush1.bf16.msra.mxu0 0
    %90 = vmatprep.subr.bf16.mxu0 0
    %91 = vmatpush1.bf16.msra.mxu0 0
    %92 = vmatprep.subr.bf16.mxu0 0
    %93 = vmatpush1.bf16.msra.mxu0 0
    %94 = vmatprep.subr.bf16.mxu0 0
    %95 = vmatpush1.bf16.msra.mxu0 0
    %96 = vmatprep.mubr.bf16.mxu0 0
    %97 = vmatmul.mubr.bf16.gmra.mrb[0].mxu0 %v58
    %v98 = vpop.f32.mrb[0].mxu0
    %v99 = vadd.f32 0.0, %v98
    %v100 = vpop.f32.mrb[0].mxu0
    %v101 = vpop.f32.mrb[0].mxu0
    %v102 = vpop.f32.mrb[0].mxu0
    %103 = vdwg.mxu0
    %v105 = vsel %vm56, %v53, 0
    %v108 = vsel %vm60, %v55, 0
    %110 = vmatprep.subr.bf16.mxu0 0
    %111 = vmatpush1.bf16.msra.mxu0 %v108
    %112 = vmatprep.subr.bf16.mxu0 0
    %113 = vmatpush1.bf16.msra.mxu0 0
    %114 = vmatprep.subr.bf16.mxu0 0
    %115 = vmatpush1.bf16.msra.mxu0 0
    %116 = vmatprep.subr.bf16.mxu0 0
    %117 = vmatpush1.bf16.msra.mxu0 0
    %118 = vmatprep.subr.bf16.mxu0 0
    %119 = vmatpush1.bf16.msra.mxu0 0
    %120 = vmatprep.subr.bf16.mxu0 0
    %121 = vmatpush1.bf16.msra.mxu0 0
    %122 = vmatprep.subr.bf16.mxu0 0
    %123 = vmatpush1.bf16.msra.mxu0 0
    %124 = vmatprep.subr.bf16.mxu0 0
    %125 = vmatpush1.bf16.msra.mxu0 0
    %126 = vmatprep.subr.bf16.mxu0 0
    %127 = vmatpush1.bf16.msra.mxu0 0
    %128 = vmatprep.subr.bf16.mxu0 0
    %129 = vmatpush1.bf16.msra.mxu0 0
    %130 = vmatprep.subr.bf16.mxu0 0
    %131 = vmatpush1.bf16.msra.mxu0 0
    %132 = vmatprep.subr.bf16.mxu0 0
    %133 = vmatpush1.bf16.msra.mxu0 0
    %134 = vmatprep.subr.bf16.mxu0 0
    %135 = vmatpush1.bf16.msra.mxu0 0
    %136 = vmatprep.subr.bf16.mxu0 0
    %137 = vmatpush1.bf16.msra.mxu0 0
    %138 = vmatprep.subr.bf16.mxu0 0
    %139 = vmatpush1.bf16.msra.mxu0 0
    %140 = vmatprep.subr.bf16.mxu0 0
    %141 = vmatpush1.bf16.msra.mxu0 0
    %142 = vmatprep.mubr.bf16.mxu0 0
    %143 = vmatmul.mubr.bf16.gmra.mrb[0].mxu0 %v105
    %v144 = vpop.f32.mrb[0].mxu0
    %v145 = vadd.f32 0.0, %v144
    %v146 = vpop.f32.mrb[0].mxu0
    %v147 = vpop.f32.mrb[0].mxu0
    %v148 = vpop.f32.mrb[0].mxu0
    %149 = vdwg.mxu0
    %v150 = vpack.c.bf16 %v99, %v99
    %v151 = vpack.c.bf16 %v145, %v145
    %v152 = vld [vmem:[%s2] sm:$0xf]
    %v153 = vld [vmem:[%s2 + $0x4] sm:$0xf]
    %v154 = vld [vmem:[%s3] sm:$0x1]
    %v156 = vlaneseq
    %v157 = vshrl.u32 %v156, 7
    %v158 = vsub.s32 0, %v157
    %v159 = vrot.slane %v154, %v158
    %v163 = vunpack.c.l.b16 %v150
    %v164 = vunpack.c.l.b16 %v151
    %v165 = vpack.c.b16 %v164, %v163
    %v168 = vunpack.c.l.b16 %v152
    %v169 = vunpack.c.l.b16 %v153
    %v170 = vpack.c.b16 %v169, %v168
    %vm172 = vcmask 130048
    %v174 = vsel %vm172, %v165, 0
    %176 = vmatprep.subr.bf16.mxu0 0
    %177 = vmatpush1.bf16.msra.mxu0 %v170
    %178 = vmatprep.subr.bf16.mxu0 0
    %179 = vmatpush1.bf16.msra.mxu0 0
    %180 = vmatprep.subr.bf16.mxu0 0
    %181 = vmatpush1.bf16.msra.mxu0 0
    %182 = vmatprep.subr.bf16.mxu0 0
    %183 = vmatpush1.bf16.msra.mxu0 0
    %184 = vmatprep.subr.bf16.mxu0 0
    %185 = vmatpush1.bf16.msra.mxu0 0
    %186 = vmatprep.subr.bf16.mxu0 0
    %187 = vmatpush1.bf16.msra.mxu0 0
    %188 = vmatprep.subr.bf16.mxu0 0
    %189 = vmatpush1.bf16.msra.mxu0 0
    %190 = vmatprep.subr.bf16.mxu0 0
    %191 = vmatpush1.bf16.msra.mxu0 0
    %192 = vmatprep.subr.bf16.mxu0 0
    %193 = vmatpush1.bf16.msra.mxu0 0
    %194 = vmatprep.subr.bf16.mxu0 0
    %195 = vmatpush1.bf16.msra.mxu0 0
    %196 = vmatprep.subr.bf16.mxu0 0
    %197 = vmatpush1.bf16.msra.mxu0 0
    %198 = vmatprep.subr.bf16.mxu0 0
    %199 = vmatpush1.bf16.msra.mxu0 0
    %200 = vmatprep.subr.bf16.mxu0 0
    %201 = vmatpush1.bf16.msra.mxu0 0
    %202 = vmatprep.subr.bf16.mxu0 0
    %203 = vmatpush1.bf16.msra.mxu0 0
    %204 = vmatprep.subr.bf16.mxu0 0
    %205 = vmatpush1.bf16.msra.mxu0 0
    %206 = vmatprep.subr.bf16.mxu0 0
    %207 = vmatpush1.bf16.msra.mxu0 0
    %208 = vmatprep.mubr.bf16.mxu0 0
    %209 = vmatmul.mubr.bf16.gmra.mrb[0].mxu0 %v174
    %v210 = vpop.f32.mrb[0].mxu0
    %v211 = vadd.f32 %v159, %v210
    %v212 = vpop.f32.mrb[0].mxu0
    %v213 = vpop.f32.mrb[0].mxu0
    %v214 = vadd.f32 %v159, %v213
    %v215 = vpop.f32.mrb[0].mxu0
    %216 = vdwg.mxu0
    %v217 = vmax.f32 %v211, 0.0
    %v218 = vmax.f32 %v214, 0.0
    %v219 = vpack.c.bf16 %v217, %v217
    %v220 = vpack.c.bf16 %v218, %v218
    %v221 = vld [vmem:[%s4] sm:$0xf]
    %v222 = vld [vmem:[%s4 + $0x4] sm:$0xf]
    %v223 = vld [vmem:[%s4 + $0x8] sm:$0xf]
    %v224 = vld [vmem:[%s4 + $0xc] sm:$0xf]
    %v227 = vunpack.c.l.b16 %v219
    %v228 = vunpack.c.l.b16 %v220
    %v229 = vpack.c.b16 %v228, %v227
    %v234 = vunpack.c.l.b16 %v221
    %v235 = vunpack.c.l.b16 %v222
    %v236 = vunpack.c.l.b16 %v223
    %v237 = vunpack.c.l.b16 %v224
    %v238 = vpack.c.b16 %v235, %v234
    %v239 = vpack.c.b16 %v237, %v236
    %vm242 = vcmask 261120
    %v244 = vsel %vm242, %v229, 0
    %246 = vmatprep.subr.bf16.mxu0 0
    %247 = vmatpush1.bf16.msra.mxu0 %v238
    %248 = vmatprep.subr.bf16.mxu0 0
    %249 = vmatpush1.bf16.msra.mxu0 %v239
    %250 = vmatprep.subr.bf16.mxu0 0
    %251 = vmatpush1.bf16.msra.mxu0 0
    %252 = vmatprep.subr.bf16.mxu0 0
    %253 = vmatpush1.bf16.msra.mxu0 0
    %254 = vmatprep.subr.bf16.mxu0 0
    %255 = vmatpush1.bf16.msra.mxu0 0
    %256 = vmatprep.subr.bf16.mxu0 0
    %257 = vmatpush1.bf16.msra.mxu0 0
    %258 = vmatprep.subr.bf16.mxu0 0
    %259 = vmatpush1.bf16.msra.mxu0 0
    %260 = vmatprep.subr.bf16.mxu0 0
    %261 = vmatpush1.bf16.msra.mxu0 0
    %262 = vmatprep.subr.bf16.mxu0 0
    %263 = vmatpush1.bf16.msra.mxu0 0
    %264 = vmatprep.subr.bf16.mxu0 0
    %265 = vmatpush1.bf16.msra.mxu0 0
    %266 = vmatprep.subr.bf16.mxu0 0
    %267 = vmatpush1.bf16.msra.mxu0 0
    %268 = vmatprep.subr.bf16.mxu0 0
    %269 = vmatpush1.bf16.msra.mxu0 0
    %270 = vmatprep.subr.bf16.mxu0 0
    %271 = vmatpush1.bf16.msra.mxu0 0
    %272 = vmatprep.subr.bf16.mxu0 0
    %273 = vmatpush1.bf16.msra.mxu0 0
    %274 = vmatprep.subr.bf16.mxu0 0
    %275 = vmatpush1.bf16.msra.mxu0 0
    %276 = vmatprep.subr.bf16.mxu0 0
    %277 = vmatpush1.bf16.msra.mxu0 0
    %278 = vmatprep.mubr.bf16.mxu0 0
    %279 = vmatmul.mubr.bf16.gmra.mrb[0].mxu0 %v244
    %v280 = vpop.f32.mrb[0].mxu0
    %v281 = vadd.f32 0.0, %v280
    %v282 = vpop.f32.mrb[0].mxu0
    %v283 = vpop.f32.mrb[0].mxu0
    %v284 = vadd.f32 0.0, %v283
    %v285 = vpop.f32.mrb[0].mxu0
    %286 = vdwg.mxu0
    %v287 = vpack.c.bf16 %v281, %v281
    %v288 = vpack.c.bf16 %v284, %v284
    %v289 = vld [vmem:[%s5] sm:$0x1]
    %v291 = vlaneseq
    %v292 = vshrl.u32 %v291, 7
    %v293 = vsub.s32 0, %v292
    %v294 = vrot.slane %v289, %v293
    %v297 = vsel %vm60, %v287, 0
    %299 = vmatprep.subr.bf16.mxu0 0
    %300 = vmatpush1.bf16.msra.mxu0 %v297
    %301 = vmatprep.subr.bf16.mxu0 0
    %302 = vmatpush1.bf16.msra.mxu0 0
    %303 = vmatprep.subr.bf16.mxu0 0
    %304 = vmatpush1.bf16.msra.mxu0 0
    %305 = vmatprep.subr.bf16.mxu0 0
    %306 = vmatpush1.bf16.msra.mxu0 0
    %307 = vmatprep.subr.bf16.mxu0 0
    %308 = vmatpush1.bf16.msra.mxu0 0
    %309 = vmatprep.subr.bf16.mxu0 0
    %310 = vmatpush1.bf16.msra.mxu0 0
    %311 = vmatprep.subr.bf16.mxu0 0
    %312 = vmatpush1.bf16.msra.mxu0 0
    %313 = vmatprep.subr.bf16.mxu0 0
    %314 = vmatpush1.bf16.msra.mxu0 0
    %315 = vmatprep.subr.bf16.mxu0 0
    %316 = vmatpush1.bf16.msra.mxu0 0
    %317 = vmatprep.subr.bf16.mxu0 0
    %318 = vmatpush1.bf16.msra.mxu0 0
    %319 = vmatprep.subr.bf16.mxu0 0
    %320 = vmatpush1.bf16.msra.mxu0 0
    %321 = vmatprep.subr.bf16.mxu0 0
    %322 = vmatpush1.bf16.msra.mxu0 0
    %323 = vmatprep.subr.bf16.mxu0 0
    %324 = vmatpush1.bf16.msra.mxu0 0
    %325 = vmatprep.subr.bf16.mxu0 0
    %326 = vmatpush1.bf16.msra.mxu0 0
    %327 = vmatprep.subr.bf16.mxu0 0
    %328 = vmatpush1.bf16.msra.mxu0 0
    %329 = vmatprep.subr.bf16.mxu0 0
    %330 = vmatpush1.bf16.msra.mxu0 0
    %331 = vmatprep.mubr.bf16.mxu0 0
    %332 = vmatmul.mubr.bf16.gmra.mrb[0].mxu0 %v58
    %v333 = vpop.f32.mrb[0].mxu0
    %v334 = vadd.f32 %v294, %v333
    %v335 = vpop.f32.mrb[0].mxu0
    %v336 = vpop.f32.mrb[0].mxu0
    %v337 = vpop.f32.mrb[0].mxu0
    %338 = vdwg.mxu0
    %v340 = vsel %vm60, %v288, 0
    %342 = vmatprep.subr.bf16.mxu0 0
    %343 = vmatpush1.bf16.msra.mxu0 %v340
    %344 = vmatprep.subr.bf16.mxu0 0
    %345 = vmatpush1.bf16.msra.mxu0 0
    %346 = vmatprep.subr.bf16.mxu0 0
    %347 = vmatpush1.bf16.msra.mxu0 0
    %348 = vmatprep.subr.bf16.mxu0 0
    %349 = vmatpush1.bf16.msra.mxu0 0
    %350 = vmatprep.subr.bf16.mxu0 0
    %351 = vmatpush1.bf16.msra.mxu0 0
    %352 = vmatprep.subr.bf16.mxu0 0
    %353 = vmatpush1.bf16.msra.mxu0 0
    %354 = vmatprep.subr.bf16.mxu0 0
    %355 = vmatpush1.bf16.msra.mxu0 0
    %356 = vmatprep.subr.bf16.mxu0 0
    %357 = vmatpush1.bf16.msra.mxu0 0
    %358 = vmatprep.subr.bf16.mxu0 0
    %359 = vmatpush1.bf16.msra.mxu0 0
    %360 = vmatprep.subr.bf16.mxu0 0
    %361 = vmatpush1.bf16.msra.mxu0 0
    %362 = vmatprep.subr.bf16.mxu0 0
    %363 = vmatpush1.bf16.msra.mxu0 0
    %364 = vmatprep.subr.bf16.mxu0 0
    %365 = vmatpush1.bf16.msra.mxu0 0
    %366 = vmatprep.subr.bf16.mxu0 0
    %367 = vmatpush1.bf16.msra.mxu0 0
    %368 = vmatprep.subr.bf16.mxu0 0
    %369 = vmatpush1.bf16.msra.mxu0 0
    %370 = vmatprep.subr.bf16.mxu0 0
    %371 = vmatpush1.bf16.msra.mxu0 0
    %372 = vmatprep.subr.bf16.mxu0 0
    %373 = vmatpush1.bf16.msra.mxu0 0
    %374 = vmatprep.mubr.bf16.mxu0 0
    %375 = vmatmul.mubr.bf16.gmra.mrb[0].mxu0 %v105
    %v376 = vpop.f32.mrb[0].mxu0
    %v377 = vadd.f32 %v294, %v376
    %v378 = vpop.f32.mrb[0].mxu0
    %v379 = vpop.f32.mrb[0].mxu0
    %v380 = vpop.f32.mrb[0].mxu0
    %381 = vdwg.mxu0
    %v382 = vmax.f32 %v334, 0.0
    %v383 = vmax.f32 %v377, 0.0
    %v384 = vld [vmem:[%s6] sm:$0xff]
    %v385 = vld [vmem:[%s6 + $0x8] sm:$0xff]
    %v386 = vld [vmem:[%s6 + $0x10] sm:$0xff]
    %v387 = vld [vmem:[%s6 + $0x18] sm:$0xff]
    %v388 = vld [vmem:[%s6 + $0x20] sm:$0xff]
    %v389 = vld [vmem:[%s6 + $0x28] sm:$0xff]
    %v390 = vld [vmem:[%s6 + $0x30] sm:$0xff]
    %v391 = vld [vmem:[%s6 + $0x38] sm:$0xff]
    %v392 = vld [vmem:[%s6 + $0x40] sm:$0xff]
    %v393 = vld [vmem:[%s6 + $0x48] sm:$0xff]
    %v394 = vld [vmem:[%s6 + $0x50] sm:$0xff]
    %v395 = vld [vmem:[%s6 + $0x58] sm:$0xff]
    %v396 = vld [vmem:[%s6 + $0x60] sm:$0xff]
    %v397 = vld [vmem:[%s6 + $0x68] sm:$0xff]
    %v398 = vld [vmem:[%s6 + $0x70] sm:$0xff]
    %v399 = vld [vmem:[%s6 + $0x78] sm:$0xff]
    %v400 = vld [vmem:[%s6 + $0x80] sm:$0xff]
    %v401 = vld [vmem:[%s6 + $0x88] sm:$0xff]
    %v402 = vld [vmem:[%s6 + $0x90] sm:$0xff]
    %v403 = vld [vmem:[%s6 + $0x98] sm:$0xff]
    %v404 = vld [vmem:[%s6 + $0xa0] sm:$0xff]
    %v405 = vld [vmem:[%s6 + $0xa8] sm:$0xff]
    %v406 = vld [vmem:[%s6 + $0xb0] sm:$0xff]
    %v407 = vld [vmem:[%s6 + $0xb8] sm:$0xff]
    %v408 = vld [vmem:[%s6 + $0xc0] sm:$0xff]
    %v409 = vld [vmem:[%s6 + $0xc8] sm:$0xff]
    %v410 = vld [vmem:[%s6 + $0xd0] sm:$0xff]
    %v411 = vld [vmem:[%s6 + $0xd8] sm:$0xff]
    %v412 = vld [vmem:[%s6 + $0xe0] sm:$0xff]
    %v413 = vld [vmem:[%s6 + $0xe8] sm:$0xff]
    %v414 = vld [vmem:[%s6 + $0xf0] sm:$0xff]
    %v415 = vld [vmem:[%s6 + $0xf8] sm:$0xff]
    %v416 = vld [vmem:[%s7] sm:$0xff]
    %v417 = vld [vmem:[%s7 + $0x8] sm:$0xff]
    %v418 = vld [vmem:[%s7 + $0x10] sm:$0xff]
    %v419 = vld [vmem:[%s7 + $0x18] sm:$0xff]
    %v420 = vld [vmem:[%s7 + $0x20] sm:$0xff]
    %v421 = vld [vmem:[%s7 + $0x28] sm:$0xff]
    %v422 = vld [vmem:[%s7 + $0x30] sm:$0xff]
    %v423 = vld [vmem:[%s7 + $0x38] sm:$0xff]
    %v424 = vld [vmem:[%s7 + $0x40] sm:$0xff]
    %v425 = vld [vmem:[%s7 + $0x48] sm:$0xff]
    %v426 = vld [vmem:[%s7 + $0x50] sm:$0xff]
    %v427 = vld [vmem:[%s7 + $0x58] sm:$0xff]
    %v428 = vld [vmem:[%s7 + $0x60] sm:$0xff]
    %v429 = vld [vmem:[%s7 + $0x68] sm:$0xff]
    %v430 = vld [vmem:[%s7 + $0x70] sm:$0xff]
    %v431 = vld [vmem:[%s7 + $0x78] sm:$0xff]
    %v432 = vld [vmem:[%s8] sm:$0x1]
    %v433 = vld [vmem:[%s8 + $0x1] sm:$0x1]
    %v434 = vld [vmem:[%s8 + $0x2] sm:$0x1]
    %v435 = vld [vmem:[%s8 + $0x3] sm:$0x1]
    loop: start=0, step=1, limit=8
    $region62: #{gnn_forward.1} parent=1 // loop_pre_header
      _
    $region63: #{gnn_forward.1} parent=1 // loop_header
      %s437 = sphi 0, %s441
      %p438 = scmp.ge.s32.totalorder %s437, 8
      %v442 = vphi 0.0, %v1063
      %v443 = vphi 0.0, %v1061
      %v444 = vphi 0.0, %v1208
    $region64: #{gnn_forward.1} parent=1 // loop_header_branch
      %440 = sbr.rel (%p438) target = $region68
    $region65: #{gnn_forward.1} parent=1 // loop_body
      %v446 = vsel %vm242, %v442, 0
      %448 = vmatprep.subr.mxu0 0.0
      %449 = vmatpush1.msra.mxu0 %v416
      %450 = vmatprep.subr.mxu0 0.0
      %451 = vmatpush1.msra.mxu0 %v417
      %452 = vmatprep.subr.mxu0 0.0
      %453 = vmatpush1.msra.mxu0 %v418
      %454 = vmatprep.subr.mxu0 0.0
      %455 = vmatpush1.msra.mxu0 %v419
      %456 = vmatprep.subr.mxu0 0.0
      %457 = vmatpush1.msra.mxu0 0.0
      %458 = vmatprep.subr.mxu0 0.0
      %459 = vmatpush1.msra.mxu0 0.0
      %460 = vmatprep.subr.mxu0 0.0
      %461 = vmatpush1.msra.mxu0 0.0
      %462 = vmatprep.subr.mxu0 0.0
      %463 = vmatpush1.msra.mxu0 0.0
      %464 = vmatprep.subr.mxu0 0.0
      %465 = vmatpush1.msra.mxu0 0.0
      %466 = vmatprep.subr.mxu0 0.0
      %467 = vmatpush1.msra.mxu0 0.0
      %468 = vmatprep.subr.mxu0 0.0
      %469 = vmatpush1.msra.mxu0 0.0
      %470 = vmatprep.subr.mxu0 0.0
      %471 = vmatpush1.msra.mxu0 0.0
      %472 = vmatprep.subr.mxu0 0.0
      %473 = vmatpush1.msra.mxu0 0.0
      %474 = vmatprep.subr.mxu0 0.0
      %475 = vmatpush1.msra.mxu0 0.0
      %476 = vmatprep.subr.mxu0 0.0
      %477 = vmatpush1.msra.mxu0 0.0
      %478 = vmatprep.subr.mxu0 0.0
      %479 = vmatpush1.msra.mxu0 0.0
      %480 = vmatprep.subr.mxu0 0.0
      %481 = vmatpush1.msra.mxu0 0.0
      %482 = vmatprep.subr.mxu0 0.0
      %483 = vmatpush1.msra.mxu0 0.0
      %484 = vmatprep.subr.mxu0 0.0
      %485 = vmatpush1.msra.mxu0 0.0
      %486 = vmatprep.subr.mxu0 0.0
      %487 = vmatpush1.msra.mxu0 0.0
      %488 = vmatprep.subr.mxu0 0.0
      %489 = vmatpush1.msra.mxu0 0.0
      %490 = vmatprep.subr.mxu0 0.0
      %491 = vmatpush1.msra.mxu0 0.0
      %492 = vmatprep.subr.mxu0 0.0
      %493 = vmatpush1.msra.mxu0 0.0
      %494 = vmatprep.subr.mxu0 0.0
      %495 = vmatpush1.msra.mxu0 0.0
      %496 = vmatprep.subr.mxu0 0.0
      %497 = vmatpush1.msra.mxu0 0.0
      %498 = vmatprep.subr.mxu0 0.0
      %499 = vmatpush1.msra.mxu0 0.0
      %500 = vmatprep.subr.mxu0 0.0
      %501 = vmatpush1.msra.mxu0 0.0
      %502 = vmatprep.subr.mxu0 0.0
      %503 = vmatpush1.msra.mxu0 0.0
      %504 = vmatprep.subr.mxu0 0.0
      %505 = vmatpush1.msra.mxu0 0.0
      %506 = vmatprep.subr.mxu0 0.0
      %507 = vmatpush1.msra.mxu0 0.0
      %508 = vmatprep.subr.mxu0 0.0
      %509 = vmatpush1.msra.mxu0 0.0
      %510 = vmatprep.subr.mxu0 0.0
      %511 = vmatpush1.msra.mxu0 0.0
      %512 = vmatprep.mubr.f32.mxu0 0.0
      %513 = vmatmul.mubr.f32.gmra.mrb[0].mxu0 %v446
      %v514 = vpop.f32.mrb[0].mxu0
      %v515 = vadd.f32 0.0, %v514
      %v516 = vpop.f32.mrb[0].mxu0
      %517 = vdwg.mxu0
      %vm518 = vcmask 523264
      %v520 = vsel %vm518, %v444, 0
      %522 = vmatprep.subr.mxu0 0.0
      %523 = vmatpush1.msra.mxu0 %v384
      %524 = vmatprep.subr.mxu0 0.0
      %525 = vmatpush1.msra.mxu0 %v385
      %526 = vmatprep.subr.mxu0 0.0
      %527 = vmatpush1.msra.mxu0 %v386
      %528 = vmatprep.subr.mxu0 0.0
      %529 = vmatpush1.msra.mxu0 %v387
      %530 = vmatprep.subr.mxu0 0.0
      %531 = vmatpush1.msra.mxu0 %v388
      %532 = vmatprep.subr.mxu0 0.0
      %533 = vmatpush1.msra.mxu0 %v389
      %534 = vmatprep.subr.mxu0 0.0
      %535 = vmatpush1.msra.mxu0 %v390
      %536 = vmatprep.subr.mxu0 0.0
      %537 = vmatpush1.msra.mxu0 %v391
      %538 = vmatprep.subr.mxu0 0.0
      %539 = vmatpush1.msra.mxu0 0.0
      %540 = vmatprep.subr.mxu0 0.0
      %541 = vmatpush1.msra.mxu0 0.0
      %542 = vmatprep.subr.mxu0 0.0
      %543 = vmatpush1.msra.mxu0 0.0
      %544 = vmatprep.subr.mxu0 0.0
      %545 = vmatpush1.msra.mxu0 0.0
      %546 = vmatprep.subr.mxu0 0.0
      %547 = vmatpush1.msra.mxu0 0.0
      %548 = vmatprep.subr.mxu0 0.0
      %549 = vmatpush1.msra.mxu0 0.0
      %550 = vmatprep.subr.mxu0 0.0
      %551 = vmatpush1.msra.mxu0 0.0
      %552 = vmatprep.subr.mxu0 0.0
      %553 = vmatpush1.msra.mxu0 0.0
      %554 = vmatprep.subr.mxu0 0.0
      %555 = vmatpush1.msra.mxu0 0.0
      %556 = vmatprep.subr.mxu0 0.0
      %557 = vmatpush1.msra.mxu0 0.0
      %558 = vmatprep.subr.mxu0 0.0
      %559 = vmatpush1.msra.mxu0 0.0
      %560 = vmatprep.subr.mxu0 0.0
      %561 = vmatpush1.msra.mxu0 0.0
      %562 = vmatprep.subr.mxu0 0.0
      %563 = vmatpush1.msra.mxu0 0.0
      %564 = vmatprep.subr.mxu0 0.0
      %565 = vmatpush1.msra.mxu0 0.0
      %566 = vmatprep.subr.mxu0 0.0
      %567 = vmatpush1.msra.mxu0 0.0
      %568 = vmatprep.subr.mxu0 0.0
      %569 = vmatpush1.msra.mxu0 0.0
      %570 = vmatprep.subr.mxu0 0.0
      %571 = vmatpush1.msra.mxu0 0.0
      %572 = vmatprep.subr.mxu0 0.0
      %573 = vmatpush1.msra.mxu0 0.0
      %574 = vmatprep.subr.mxu0 0.0
      %575 = vmatpush1.msra.mxu0 0.0
      %576 = vmatprep.subr.mxu0 0.0
      %577 = vmatpush1.msra.mxu0 0.0
      %578 = vmatprep.subr.mxu0 0.0
      %579 = vmatpush1.msra.mxu0 0.0
      %580 = vmatprep.subr.mxu0 0.0
      %581 = vmatpush1.msra.mxu0 0.0
      %582 = vmatprep.subr.mxu0 0.0
      %583 = vmatpush1.msra.mxu0 0.0
      %584 = vmatprep.subr.mxu0 0.0
      %585 = vmatpush1.msra.mxu0 0.0
      %586 = vmatprep.mubr.f32.mxu0 0.0
      %587 = vmatmul.mubr.f32.gmra.mrb[0].mxu0 %v520
      %v588 = vpop.f32.mrb[0].mxu0
      %v589 = vadd.f32 %v515, %v588
      %v590 = vpop.f32.mrb[0].mxu0
      %591 = vdwg.mxu0
      %v593 = vlaneseq
      %v594 = vshrl.u32 %v593, 7
      %v595 = vsub.s32 0, %v594
      %v596 = vrot.slane %v432, %v595
      %v598 = vadd.f32 %v589, %v596
      %v599 = vxor.u32 %v598, 2147483648
      %v600 = vmul.f32 %v599, 1.442695
      %v601 = vpow.pop %v600
      %v602 = vadd.f32 %v601, 1.0
      %v603 = vrcp.pop %v602
      %v604 = vmul.f32 1.0, %v603
      %605 = vmatprep.subr.mxu0 0.0
      %606 = vmatpush1.msra.mxu0 %v420
      %607 = vmatprep.subr.mxu0 0.0
      %608 = vmatpush1.msra.mxu0 %v421
      %609 = vmatprep.subr.mxu0 0.0
      %610 = vmatpush1.msra.mxu0 %v422
      %611 = vmatprep.subr.mxu0 0.0
      %612 = vmatpush1.msra.mxu0 %v423
      %613 = vmatprep.subr.mxu0 0.0
      %614 = vmatpush1.msra.mxu0 0.0
      %615 = vmatprep.subr.mxu0 0.0
      %616 = vmatpush1.msra.mxu0 0.0
      %617 = vmatprep.subr.mxu0 0.0
      %618 = vmatpush1.msra.mxu0 0.0
      %619 = vmatprep.subr.mxu0 0.0
      %620 = vmatpush1.msra.mxu0 0.0
      %621 = vmatprep.subr.mxu0 0.0
      %622 = vmatpush1.msra.mxu0 0.0
      %623 = vmatprep.subr.mxu0 0.0
      %624 = vmatpush1.msra.mxu0 0.0
      %625 = vmatprep.subr.mxu0 0.0
      %626 = vmatpush1.msra.mxu0 0.0
      %627 = vmatprep.subr.mxu0 0.0
      %628 = vmatpush1.msra.mxu0 0.0
      %629 = vmatprep.subr.mxu0 0.0
      %630 = vmatpush1.msra.mxu0 0.0
      %631 = vmatprep.subr.mxu0 0.0
      %632 = vmatpush1.msra.mxu0 0.0
      %633 = vmatprep.subr.mxu0 0.0
      %634 = vmatpush1.msra.mxu0 0.0
      %635 = vmatprep.subr.mxu0 0.0
      %636 = vmatpush1.msra.mxu0 0.0
      %637 = vmatprep.subr.mxu0 0.0
      %638 = vmatpush1.msra.mxu0 0.0
      %639 = vmatprep.subr.mxu0 0.0
      %640 = vmatpush1.msra.mxu0 0.0
      %641 = vmatprep.subr.mxu0 0.0
      %642 = vmatpush1.msra.mxu0 0.0
      %643 = vmatprep.subr.mxu0 0.0
      %644 = vmatpush1.msra.mxu0 0.0
      %645 = vmatprep.subr.mxu0 0.0
      %646 = vmatpush1.msra.mxu0 0.0
      %647 = vmatprep.subr.mxu0 0.0
      %648 = vmatpush1.msra.mxu0 0.0
      %649 = vmatprep.subr.mxu0 0.0
      %650 = vmatpush1.msra.mxu0 0.0
      %651 = vmatprep.subr.mxu0 0.0
      %652 = vmatpush1.msra.mxu0 0.0
      %653 = vmatprep.subr.mxu0 0.0
      %654 = vmatpush1.msra.mxu0 0.0
      %655 = vmatprep.subr.mxu0 0.0
      %656 = vmatpush1.msra.mxu0 0.0
      %657 = vmatprep.subr.mxu0 0.0
      %658 = vmatpush1.msra.mxu0 0.0
      %659 = vmatprep.subr.mxu0 0.0
      %660 = vmatpush1.msra.mxu0 0.0
      %661 = vmatprep.subr.mxu0 0.0
      %662 = vmatpush1.msra.mxu0 0.0
      %663 = vmatprep.subr.mxu0 0.0
      %664 = vmatpush1.msra.mxu0 0.0
      %665 = vmatprep.subr.mxu0 0.0
      %666 = vmatpush1.msra.mxu0 0.0
      %667 = vmatprep.subr.mxu0 0.0
      %668 = vmatpush1.msra.mxu0 0.0
      %669 = vmatprep.mubr.f32.mxu0 0.0
      %670 = vmatmul.mubr.f32.gmra.mrb[0].mxu0 %v446
      %v671 = vpop.f32.mrb[0].mxu0
      %v672 = vadd.f32 0.0, %v671
      %v673 = vpop.f32.mrb[0].mxu0
      %674 = vdwg.mxu0
      %675 = vmatprep.subr.mxu0 0.0
      %676 = vmatpush1.msra.mxu0 %v392
      %677 = vmatprep.subr.mxu0 0.0
      %678 = vmatpush1.msra.mxu0 %v393
      %679 = vmatprep.subr.mxu0 0.0
      %680 = vmatpush1.msra.mxu0 %v394
      %681 = vmatprep.subr.mxu0 0.0
      %682 = vmatpush1.msra.mxu0 %v395
      %683 = vmatprep.subr.mxu0 0.0
      %684 = vmatpush1.msra.mxu0 %v396
      %685 = vmatprep.subr.mxu0 0.0
      %686 = vmatpush1.msra.mxu0 %v397
      %687 = vmatprep.subr.mxu0 0.0
      %688 = vmatpush1.msra.mxu0 %v398
      %689 = vmatprep.subr.mxu0 0.0
      %690 = vmatpush1.msra.mxu0 %v399
      %691 = vmatprep.subr.mxu0 0.0
      %692 = vmatpush1.msra.mxu0 0.0
      %693 = vmatprep.subr.mxu0 0.0
      %694 = vmatpush1.msra.mxu0 0.0
      %695 = vmatprep.subr.mxu0 0.0
      %696 = vmatpush1.msra.mxu0 0.0
      %697 = vmatprep.subr.mxu0 0.0
      %698 = vmatpush1.msra.mxu0 0.0
      %699 = vmatprep.subr.mxu0 0.0
      %700 = vmatpush1.msra.mxu0 0.0
      %701 = vmatprep.subr.mxu0 0.0
      %702 = vmatpush1.msra.mxu0 0.0
      %703 = vmatprep.subr.mxu0 0.0
      %704 = vmatpush1.msra.mxu0 0.0
      %705 = vmatprep.subr.mxu0 0.0
      %706 = vmatpush1.msra.mxu0 0.0
      %707 = vmatprep.subr.mxu0 0.0
      %708 = vmatpush1.msra.mxu0 0.0
      %709 = vmatprep.subr.mxu0 0.0
      %710 = vmatpush1.msra.mxu0 0.0
      %711 = vmatprep.subr.mxu0 0.0
      %712 = vmatpush1.msra.mxu0 0.0
      %713 = vmatprep.subr.mxu0 0.0
      %714 = vmatpush1.msra.mxu0 0.0
      %715 = vmatprep.subr.mxu0 0.0
      %716 = vmatpush1.msra.mxu0 0.0
      %717 = vmatprep.subr.mxu0 0.0
      %718 = vmatpush1.msra.mxu0 0.0
      %719 = vmatprep.subr.mxu0 0.0
      %720 = vmatpush1.msra.mxu0 0.0
      %721 = vmatprep.subr.mxu0 0.0
      %722 = vmatpush1.msra.mxu0 0.0
      %723 = vmatprep.subr.mxu0 0.0
      %724 = vmatpush1.msra.mxu0 0.0
      %725 = vmatprep.subr.mxu0 0.0
      %726 = vmatpush1.msra.mxu0 0.0
      %727 = vmatprep.subr.mxu0 0.0
      %728 = vmatpush1.msra.mxu0 0.0
      %729 = vmatprep.subr.mxu0 0.0
      %730 = vmatpush1.msra.mxu0 0.0
      %731 = vmatprep.subr.mxu0 0.0
      %732 = vmatpush1.msra.mxu0 0.0
      %733 = vmatprep.subr.mxu0 0.0
      %734 = vmatpush1.msra.mxu0 0.0
      %735 = vmatprep.subr.mxu0 0.0
      %736 = vmatpush1.msra.mxu0 0.0
      %737 = vmatprep.subr.mxu0 0.0
      %738 = vmatpush1.msra.mxu0 0.0
      %739 = vmatprep.mubr.f32.mxu0 0.0
      %740 = vmatmul.mubr.f32.gmra.mrb[0].mxu0 %v520
      %v741 = vpop.f32.mrb[0].mxu0
      %v742 = vadd.f32 %v672, %v741
      %v743 = vpop.f32.mrb[0].mxu0
      %744 = vdwg.mxu0
      %v746 = vlaneseq
      %v747 = vshrl.u32 %v746, 7
      %v748 = vsub.s32 0, %v747
      %v749 = vrot.slane %v433, %v748
      %v751 = vadd.f32 %v742, %v749
      %v752 = vxor.u32 %v751, 2147483648
      %v753 = vmul.f32 %v752, 1.442695
      %v754 = vpow.pop %v753
      %v755 = vadd.f32 %v754, 1.0
      %v756 = vrcp.pop %v755
      %v757 = vmul.f32 1.0, %v756
      %758 = vmatprep.subr.mxu0 0.0
      %759 = vmatpush1.msra.mxu0 %v424
      %760 = vmatprep.subr.mxu0 0.0
      %761 = vmatpush1.msra.mxu0 %v425
      %762 = vmatprep.subr.mxu0 0.0
      %763 = vmatpush1.msra.mxu0 %v426
      %764 = vmatprep.subr.mxu0 0.0
      %765 = vmatpush1.msra.mxu0 %v427
      %766 = vmatprep.subr.mxu0 0.0
      %767 = vmatpush1.msra.mxu0 0.0
      %768 = vmatprep.subr.mxu0 0.0
      %769 = vmatpush1.msra.mxu0 0.0
      %770 = vmatprep.subr.mxu0 0.0
      %771 = vmatpush1.msra.mxu0 0.0
      %772 = vmatprep.subr.mxu0 0.0
      %773 = vmatpush1.msra.mxu0 0.0
      %774 = vmatprep.subr.mxu0 0.0
      %775 = vmatpush1.msra.mxu0 0.0
      %776 = vmatprep.subr.mxu0 0.0
      %777 = vmatpush1.msra.mxu0 0.0
      %778 = vmatprep.subr.mxu0 0.0
      %779 = vmatpush1.msra.mxu0 0.0
      %780 = vmatprep.subr.mxu0 0.0
      %781 = vmatpush1.msra.mxu0 0.0
      %782 = vmatprep.subr.mxu0 0.0
      %783 = vmatpush1.msra.mxu0 0.0
      %784 = vmatprep.subr.mxu0 0.0
      %785 = vmatpush1.msra.mxu0 0.0
      %786 = vmatprep.subr.mxu0 0.0
      %787 = vmatpush1.msra.mxu0 0.0
      %788 = vmatprep.subr.mxu0 0.0
      %789 = vmatpush1.msra.mxu0 0.0
      %790 = vmatprep.subr.mxu0 0.0
      %791 = vmatpush1.msra.mxu0 0.0
      %792 = vmatprep.subr.mxu0 0.0
      %793 = vmatpush1.msra.mxu0 0.0
      %794 = vmatprep.subr.mxu0 0.0
      %795 = vmatpush1.msra.mxu0 0.0
      %796 = vmatprep.subr.mxu0 0.0
      %797 = vmatpush1.msra.mxu0 0.0
      %798 = vmatprep.subr.mxu0 0.0
      %799 = vmatpush1.msra.mxu0 0.0
      %800 = vmatprep.subr.mxu0 0.0
      %801 = vmatpush1.msra.mxu0 0.0
      %802 = vmatprep.subr.mxu0 0.0
      %803 = vmatpush1.msra.mxu0 0.0
      %804 = vmatprep.subr.mxu0 0.0
      %805 = vmatpush1.msra.mxu0 0.0
      %806 = vmatprep.subr.mxu0 0.0
      %807 = vmatpush1.msra.mxu0 0.0
      %808 = vmatprep.subr.mxu0 0.0
      %809 = vmatpush1.msra.mxu0 0.0
      %810 = vmatprep.subr.mxu0 0.0
      %811 = vmatpush1.msra.mxu0 0.0
      %812 = vmatprep.subr.mxu0 0.0
      %813 = vmatpush1.msra.mxu0 0.0
      %814 = vmatprep.subr.mxu0 0.0
      %815 = vmatpush1.msra.mxu0 0.0
      %816 = vmatprep.subr.mxu0 0.0
      %817 = vmatpush1.msra.mxu0 0.0
      %818 = vmatprep.subr.mxu0 0.0
      %819 = vmatpush1.msra.mxu0 0.0
      %820 = vmatprep.subr.mxu0 0.0
      %821 = vmatpush1.msra.mxu0 0.0
      %822 = vmatprep.mubr.f32.mxu0 0.0
      %823 = vmatmul.mubr.f32.gmra.mrb[0].mxu0 %v446
      %v824 = vpop.f32.mrb[0].mxu0
      %v825 = vadd.f32 0.0, %v824
      %v826 = vpop.f32.mrb[0].mxu0
      %827 = vdwg.mxu0
      %828 = vmatprep.subr.mxu0 0.0
      %829 = vmatpush1.msra.mxu0 %v400
      %830 = vmatprep.subr.mxu0 0.0
      %831 = vmatpush1.msra.mxu0 %v401
      %832 = vmatprep.subr.mxu0 0.0
      %833 = vmatpush1.msra.mxu0 %v402
      %834 = vmatprep.subr.mxu0 0.0
      %835 = vmatpush1.msra.mxu0 %v403
      %836 = vmatprep.subr.mxu0 0.0
      %837 = vmatpush1.msra.mxu0 %v404
      %838 = vmatprep.subr.mxu0 0.0
      %839 = vmatpush1.msra.mxu0 %v405
      %840 = vmatprep.subr.mxu0 0.0
      %841 = vmatpush1.msra.mxu0 %v406
      %842 = vmatprep.subr.mxu0 0.0
      %843 = vmatpush1.msra.mxu0 %v407
      %844 = vmatprep.subr.mxu0 0.0
      %845 = vmatpush1.msra.mxu0 0.0
      %846 = vmatprep.subr.mxu0 0.0
      %847 = vmatpush1.msra.mxu0 0.0
      %848 = vmatprep.subr.mxu0 0.0
      %849 = vmatpush1.msra.mxu0 0.0
      %850 = vmatprep.subr.mxu0 0.0
      %851 = vmatpush1.msra.mxu0 0.0
      %852 = vmatprep.subr.mxu0 0.0
      %853 = vmatpush1.msra.mxu0 0.0
      %854 = vmatprep.subr.mxu0 0.0
      %855 = vmatpush1.msra.mxu0 0.0
      %856 = vmatprep.subr.mxu0 0.0
      %857 = vmatpush1.msra.mxu0 0.0
      %858 = vmatprep.subr.mxu0 0.0
      %859 = vmatpush1.msra.mxu0 0.0
      %860 = vmatprep.subr.mxu0 0.0
      %861 = vmatpush1.msra.mxu0 0.0
      %862 = vmatprep.subr.mxu0 0.0
      %863 = vmatpush1.msra.mxu0 0.0
      %864 = vmatprep.subr.mxu0 0.0
      %865 = vmatpush1.msra.mxu0 0.0
      %866 = vmatprep.subr.mxu0 0.0
      %867 = vmatpush1.msra.mxu0 0.0
      %868 = vmatprep.subr.mxu0 0.0
      %869 = vmatpush1.msra.mxu0 0.0
      %870 = vmatprep.subr.mxu0 0.0
      %871 = vmatpush1.msra.mxu0 0.0
      %872 = vmatprep.subr.mxu0 0.0
      %873 = vmatpush1.msra.mxu0 0.0
      %874 = vmatprep.subr.mxu0 0.0
      %875 = vmatpush1.msra.mxu0 0.0
      %876 = vmatprep.subr.mxu0 0.0
      %877 = vmatpush1.msra.mxu0 0.0
      %878 = vmatprep.subr.mxu0 0.0
      %879 = vmatpush1.msra.mxu0 0.0
      %880 = vmatprep.subr.mxu0 0.0
      %881 = vmatpush1.msra.mxu0 0.0
      %882 = vmatprep.subr.mxu0 0.0
      %883 = vmatpush1.msra.mxu0 0.0
      %884 = vmatprep.subr.mxu0 0.0
      %885 = vmatpush1.msra.mxu0 0.0
      %886 = vmatprep.subr.mxu0 0.0
      %887 = vmatpush1.msra.mxu0 0.0
      %888 = vmatprep.subr.mxu0 0.0
      %889 = vmatpush1.msra.mxu0 0.0
      %890 = vmatprep.subr.mxu0 0.0
      %891 = vmatpush1.msra.mxu0 0.0
      %892 = vmatprep.mubr.f32.mxu0 0.0
      %893 = vmatmul.mubr.f32.gmra.mrb[0].mxu0 %v520
      %v894 = vpop.f32.mrb[0].mxu0
      %v895 = vadd.f32 %v825, %v894
      %v896 = vpop.f32.mrb[0].mxu0
      %897 = vdwg.mxu0
      %v899 = vlaneseq
      %v900 = vshrl.u32 %v899, 7
      %v901 = vsub.s32 0, %v900
      %v902 = vrot.slane %v434, %v901
      %v904 = vadd.f32 %v895, %v902
      %v905 = vtanh.pop %v904
      %906 = vmatprep.subr.mxu0 0.0
      %907 = vmatpush1.msra.mxu0 %v428
      %908 = vmatprep.subr.mxu0 0.0
      %909 = vmatpush1.msra.mxu0 %v429
      %910 = vmatprep.subr.mxu0 0.0
      %911 = vmatpush1.msra.mxu0 %v430
      %912 = vmatprep.subr.mxu0 0.0
      %913 = vmatpush1.msra.mxu0 %v431
      %914 = vmatprep.subr.mxu0 0.0
      %915 = vmatpush1.msra.mxu0 0.0
      %916 = vmatprep.subr.mxu0 0.0
      %917 = vmatpush1.msra.mxu0 0.0
      %918 = vmatprep.subr.mxu0 0.0
      %919 = vmatpush1.msra.mxu0 0.0
      %920 = vmatprep.subr.mxu0 0.0
      %921 = vmatpush1.msra.mxu0 0.0
      %922 = vmatprep.subr.mxu0 0.0
      %923 = vmatpush1.msra.mxu0 0.0
      %924 = vmatprep.subr.mxu0 0.0
      %925 = vmatpush1.msra.mxu0 0.0
      %926 = vmatprep.subr.mxu0 0.0
      %927 = vmatpush1.msra.mxu0 0.0
      %928 = vmatprep.subr.mxu0 0.0
      %929 = vmatpush1.msra.mxu0 0.0
      %930 = vmatprep.subr.mxu0 0.0
      %931 = vmatpush1.msra.mxu0 0.0
      %932 = vmatprep.subr.mxu0 0.0
      %933 = vmatpush1.msra.mxu0 0.0
      %934 = vmatprep.subr.mxu0 0.0
      %935 = vmatpush1.msra.mxu0 0.0
      %936 = vmatprep.subr.mxu0 0.0
      %937 = vmatpush1.msra.mxu0 0.0
      %938 = vmatprep.subr.mxu0 0.0
      %939 = vmatpush1.msra.mxu0 0.0
      %940 = vmatprep.subr.mxu0 0.0
      %941 = vmatpush1.msra.mxu0 0.0
      %942 = vmatprep.subr.mxu0 0.0
      %943 = vmatpush1.msra.mxu0 0.0
      %944 = vmatprep.subr.mxu0 0.0
      %945 = vmatpush1.msra.mxu0 0.0
      %946 = vmatprep.subr.mxu0 0.0
      %947 = vmatpush1.msra.mxu0 0.0
      %948 = vmatprep.subr.mxu0 0.0
      %949 = vmatpush1.msra.mxu0 0.0
      %950 = vmatprep.subr.mxu0 0.0
      %951 = vmatpush1.msra.mxu0 0.0
      %952 = vmatprep.subr.mxu0 0.0
      %953 = vmatpush1.msra.mxu0 0.0
      %954 = vmatprep.subr.mxu0 0.0
      %955 = vmatpush1.msra.mxu0 0.0
      %956 = vmatprep.subr.mxu0 0.0
      %957 = vmatpush1.msra.mxu0 0.0
      %958 = vmatprep.subr.mxu0 0.0
      %959 = vmatpush1.msra.mxu0 0.0
      %960 = vmatprep.subr.mxu0 0.0
      %961 = vmatpush1.msra.mxu0 0.0
      %962 = vmatprep.subr.mxu0 0.0
      %963 = vmatpush1.msra.mxu0 0.0
      %964 = vmatprep.subr.mxu0 0.0
      %965 = vmatpush1.msra.mxu0 0.0
      %966 = vmatprep.subr.mxu0 0.0
      %967 = vmatpush1.msra.mxu0 0.0
      %968 = vmatprep.subr.mxu0 0.0
      %969 = vmatpush1.msra.mxu0 0.0
      %970 = vmatprep.mubr.f32.mxu0 0.0
      %971 = vmatmul.mubr.f32.gmra.mrb[0].mxu0 %v446
      %v972 = vpop.f32.mrb[0].mxu0
      %v973 = vadd.f32 0.0, %v972
      %v974 = vpop.f32.mrb[0].mxu0
      %975 = vdwg.mxu0
      %976 = vmatprep.subr.mxu0 0.0
      %977 = vmatpush1.msra.mxu0 %v408
      %978 = vmatprep.subr.mxu0 0.0
      %979 = vmatpush1.msra.mxu0 %v409
      %980 = vmatprep.subr.mxu0 0.0
      %981 = vmatpush1.msra.mxu0 %v410
      %982 = vmatprep.subr.mxu0 0.0
      %983 = vmatpush1.msra.mxu0 %v411
      %984 = vmatprep.subr.mxu0 0.0
      %985 = vmatpush1.msra.mxu0 %v412
      %986 = vmatprep.subr.mxu0 0.0
      %987 = vmatpush1.msra.mxu0 %v413
      %988 = vmatprep.subr.mxu0 0.0
      %989 = vmatpush1.msra.mxu0 %v414
      %990 = vmatprep.subr.mxu0 0.0
      %991 = vmatpush1.msra.mxu0 %v415
      %992 = vmatprep.subr.mxu0 0.0
      %993 = vmatpush1.msra.mxu0 0.0
      %994 = vmatprep.subr.mxu0 0.0
      %995 = vmatpush1.msra.mxu0 0.0
      %996 = vmatprep.subr.mxu0 0.0
      %997 = vmatpush1.msra.mxu0 0.0
      %998 = vmatprep.subr.mxu0 0.0
      %999 = vmatpush1.msra.mxu0 0.0
      %1000 = vmatprep.subr.mxu0 0.0
      %1001 = vmatpush1.msra.mxu0 0.0
      %1002 = vmatprep.subr.mxu0 0.0
      %1003 = vmatpush1.msra.mxu0 0.0
      %1004 = vmatprep.subr.mxu0 0.0
      %1005 = vmatpush1.msra.mxu0 0.0
      %1006 = vmatprep.subr.mxu0 0.0
      %1007 = vmatpush1.msra.mxu0 0.0
      %1008 = vmatprep.subr.mxu0 0.0
      %1009 = vmatpush1.msra.mxu0 0.0
      %1010 = vmatprep.subr.mxu0 0.0
      %1011 = vmatpush1.msra.mxu0 0.0
      %1012 = vmatprep.subr.mxu0 0.0
      %1013 = vmatpush1.msra.mxu0 0.0
      %1014 = vmatprep.subr.mxu0 0.0
      %1015 = vmatpush1.msra.mxu0 0.0
      %1016 = vmatprep.subr.mxu0 0.0
      %1017 = vmatpush1.msra.mxu0 0.0
      %1018 = vmatprep.subr.mxu0 0.0
      %1019 = vmatpush1.msra.mxu0 0.0
      %1020 = vmatprep.subr.mxu0 0.0
      %1021 = vmatpush1.msra.mxu0 0.0
      %1022 = vmatprep.subr.mxu0 0.0
      %1023 = vmatpush1.msra.mxu0 0.0
      %1024 = vmatprep.subr.mxu0 0.0
      %1025 = vmatpush1.msra.mxu0 0.0
      %1026 = vmatprep.subr.mxu0 0.0
      %1027 = vmatpush1.msra.mxu0 0.0
      %1028 = vmatprep.subr.mxu0 0.0
      %1029 = vmatpush1.msra.mxu0 0.0
      %1030 = vmatprep.subr.mxu0 0.0
      %1031 = vmatpush1.msra.mxu0 0.0
      %1032 = vmatprep.subr.mxu0 0.0
      %1033 = vmatpush1.msra.mxu0 0.0
      %1034 = vmatprep.subr.mxu0 0.0
      %1035 = vmatpush1.msra.mxu0 0.0
      %1036 = vmatprep.subr.mxu0 0.0
      %1037 = vmatpush1.msra.mxu0 0.0
      %1038 = vmatprep.subr.mxu0 0.0
      %1039 = vmatpush1.msra.mxu0 0.0
      %1040 = vmatprep.mubr.f32.mxu0 0.0
      %1041 = vmatmul.mubr.f32.gmra.mrb[0].mxu0 %v520
      %v1042 = vpop.f32.mrb[0].mxu0
      %v1043 = vadd.f32 %v973, %v1042
      %v1044 = vpop.f32.mrb[0].mxu0
      %1045 = vdwg.mxu0
      %v1047 = vlaneseq
      %v1048 = vshrl.u32 %v1047, 7
      %v1049 = vsub.s32 0, %v1048
      %v1050 = vrot.slane %v435, %v1049
      %v1052 = vadd.f32 %v1043, %v1050
      %v1053 = vxor.u32 %v1052, 2147483648
      %v1054 = vmul.f32 %v1053, 1.442695
      %v1055 = vpow.pop %v1054
      %v1056 = vadd.f32 %v1055, 1.0
      %v1057 = vrcp.pop %v1056
      %v1058 = vmul.f32 1.0, %v1057
      %v1059 = vmul.f32 %v757, %v443
      %v1060 = vmul.f32 %v604, %v905
      %v1061 = vadd.f32 %v1059, %v1060
      %v1062 = vtanh.pop %v1061
      %v1063 = vmul.f32 %v1058, %v1062
      %v1066 = vunpack.c.l.s4 1966171168
      %v1067 = vunpack.c.0.s8 %v1066
      %v1068 = vlaneseq
      %v1069 = vshrl.u32 %v1068, 7
      %v1070 = vsub.s32 %v1067, %v1069
      %v1071 = vrot.slane %v1063, %v1070
      %v1072 = vcombine.high %v1071, %v1071
      %v1074 = vunpack.c.l.s4 1966171168
      %v1075 = vunpack.c.0.s8 %v1074
      %v1076 = vlaneseq
      %v1077 = vshrl.u32 %v1076, 7
      %v1078 = vsub.s32 %v1075, %v1077
      %v1079 = vrot.slane %v1071, %v1078
      %v1081 = vunpack.c.l.s4 1966171168
      %v1082 = vunpack.c.0.s8 %v1081
      %v1083 = vlaneseq
      %v1084 = vshrl.u32 %v1083, 7
      %v1085 = vsub.s32 %v1082, %v1084
      %v1086 = vrot.slane %v1072, %v1085
      %v1087 = vlaneseq
      %v1088 = vshrl.u32 %v1087, 7
      %v1089 = vsub.s32 0, %v1088
      %v1090 = vrot.slane %v1079, %v1089
      %v1091 = vlaneseq
      %v1092 = vshrl.u32 %v1091, 7
      %v1093 = vsub.s32 0, %v1092
      %v1094 = vrot.slane %v1086, %v1093
      %v1097 = vmul.f32 %v382, %v1090
      %v1098 = vmul.f32 %v383, %v1094
      %v1099 = vsel %vm242, %v1097, 0.0
      %1100 = vadd.xlane.f32.xlu0 %v1099
      %v1101 = vpop.xlane.xlu0 %1100
      %v1102 = vsel %vm242, %v1098, 0.0
      %1103 = vadd.xlane.f32.xlu0 %v1102
      %v1104 = vpop.xlane.xlu0 %1103
      %v1107 = vlaneseq
      %v1108 = vand.u32 %v1107, 127
      %v1109 = vlaneseq
      %v1110 = vshrl.u32 %v1109, 7
      %v1111 = vsub.s32 %v1108, %v1110
      %v1112 = vrot.slane %v1101, %v1111
      %v1113 = vlaneseq
      %v1114 = vshrl.u32 %v1113, 7
      %v1115 = vsub.s32 %v1108, %v1114
      %v1116 = vrot.slane %v1104, %v1115
      %vm1117 = vcmask 1041409
      %v1118 = vsel %vm1117, %v1116, %v1112
      %vm1120 = vcmask 58368
      %v1121 = vsel %vm1120, %v1118, -inf
      %1122 = vmax.xlane.f32.xlu0 %v1121
      %v1123 = vpop.xlane.xlu0 %1122
      %v1125 = vlaneseq
      %v1126 = vshrl.u32 %v1125, 7
      %v1127 = vsub.s32 0, %v1126
      %v1128 = vrot.slane %v1123, %v1127
      %v1129 = vlaneseq
      %v1130 = vshrl.u32 %v1129, 7
      %v1131 = vsub.s32 1, %v1130
      %v1132 = vrot.slane %v1123, %v1131
      %v1135 = vsub.f32 %v1101, %v1128
      %v1136 = vsub.f32 %v1104, %v1132
      %v1137 = vmul.f32 %v1135, 1.442695
      %v1138 = vpow.pop %v1137
      %v1139 = vmul.f32 %v1136, 1.442695
      %v1140 = vpow.pop %v1139
      %1143 = vset.pattern.permute.xlu0 0
      %1144 = vperm.xlu0 %1143, %v1138
      %v1145 = vpop.permute.xlu0 %1144
      %1146 = vset.pattern.permute.xlu0 0
      %1147 = vperm.xlu0 %1146, %v1140
      %v1148 = vpop.permute.xlu0 %1147
      %v1149 = vlaneseq
      %v1150 = vshrl.u32 %v1149, 7
      %v1151 = vsub.s32 %v1108, %v1150
      %v1152 = vrot.slane %v1145, %v1151
      %v1153 = vlaneseq
      %v1154 = vshrl.u32 %v1153, 7
      %v1155 = vsub.s32 %v1108, %v1154
      %v1156 = vrot.slane %v1148, %v1155
      %v1157 = vsel %vm1117, %v1156, %v1152
      %v1159 = vsel %vm1120, %v1157, 0.0
      %1160 = vadd.xlane.f32.xlu0 %v1159
      %v1161 = vpop.xlane.xlu0 %1160
      %v1162 = vrcp.pop %v1161
      %v1164 = vlaneseq
      %v1165 = vshrl.u32 %v1164, 7
      %v1166 = vsub.s32 0, %v1165
      %v1167 = vrot.slane %v1162, %v1166
      %v1168 = vlaneseq
      %v1169 = vshrl.u32 %v1168, 7
      %v1170 = vsub.s32 1, %v1169
      %v1171 = vrot.slane %v1162, %v1170
      %v1174 = vmul.f32 %v1138, %v1167
      %v1175 = vmul.f32 %v1140, %v1171
      %1177 = vset.pattern.permute.xlu0 0
      %1178 = vperm.xlu0 %1177, %v1174
      %v1179 = vpop.permute.xlu0 %1178
      %1182 = vset.pattern.permute.xlu0 0
      %1183 = vperm.xlu0 %1182, %v1175
      %v1184 = vpop.permute.xlu0 %1183
      %v1186 = vmul.f32 %v1179, %v382
      %v1187 = vmul.f32 %v1184, %v383
      %v1188 = vsel %vm242, %v1186, 0.0
      %v1189 = vrot.slane %v1188, 4
      %v1190 = vadd.f32 %v1188, %v1189
      %v1191 = vrot.slane %v1190, 2
      %v1192 = vadd.f32 %v1190, %v1191
      %v1193 = vrot.slane %v1192, 1
      %v1194 = vadd.f32 %v1192, %v1193
      %v1195 = vsel %vm242, %v1187, 0.0
      %v1196 = vrot.slane %v1195, 4
      %v1197 = vadd.f32 %v1195, %v1196
      %v1198 = vrot.slane %v1197, 2
      %v1199 = vadd.f32 %v1197, %v1198
      %v1200 = vrot.slane %v1199, 1
      %v1201 = vadd.f32 %v1199, %v1200
      %v1204 = vsel %vm1117, %v1201, %v1194
      %1205 = vrot.lane.b32.xlu0 %v1204, 32
      %v1206 = vpop.permute.xlu0 %1205
      %v1208 = vsel %vm242, %v1063, %v1206
    $region66: #{gnn_forward.1} parent=1 // loop_footer
      %s441 = sadd.s32 1, %s437
    $region67: #{gnn_forward.1} parent=1 // loop_footer_branch
      %436 = sbr.rel target = $region63
    $region68: #{gnn_forward.1} parent=1 // loop_exit
      _
    %v1209 = vld [vmem:[%s9] sm:$0xff]
    %v1210 = vld [vmem:[%s9 + $0x8] sm:$0xff]
    %v1211 = vld [vmem:[%s9 + $0x10] sm:$0xff]
    %v1212 = vld [vmem:[%s9 + $0x18] sm:$0xff]
    %v1213 = vld [vmem:[%s9 + $0x20] sm:$0xff]
    %v1214 = vld [vmem:[%s9 + $0x28] sm:$0xff]
    %v1215 = vld [vmem:[%s9 + $0x30] sm:$0xff]
    %v1216 = vld [vmem:[%s9 + $0x38] sm:$0xff]
    %v1217 = vld [vmem:[%s10] sm:$0x1]
    %v1219 = vlaneseq
    %v1220 = vshrl.u32 %v1219, 7
    %v1221 = vsub.s32 0, %v1220
    %v1222 = vrot.slane %v1217, %v1221
    %vm1224 = vcmask 523264
    %v1226 = vsel %vm1224, %v444, 0
    %1228 = vmatprep.subr.mxu0 0.0
    %1229 = vmatpush1.msra.mxu0 %v1209
    %1230 = vmatprep.subr.mxu0 0.0
    %1231 = vmatpush1.msra.mxu0 %v1210
    %1232 = vmatprep.subr.mxu0 0.0
    %1233 = vmatpush1.msra.mxu0 %v1211
    %1234 = vmatprep.subr.mxu0 0.0
    %1235 = vmatpush1.msra.mxu0 %v1212
    %1236 = vmatprep.subr.mxu0 0.0
    %1237 = vmatpush1.msra.mxu0 %v1213
    %1238 = vmatprep.subr.mxu0 0.0
    %1239 = vmatpush1.msra.mxu0 %v1214
    %1240 = vmatprep.subr.mxu0 0.0
    %1241 = vmatpush1.msra.mxu0 %v1215
    %1242 = vmatprep.subr.mxu0 0.0
    %1243 = vmatpush1.msra.mxu0 %v1216
    %1244 = vmatprep.subr.mxu0 0.0
    %1245 = vmatpush1.msra.mxu0 0.0
    %1246 = vmatprep.subr.mxu0 0.0
    %1247 = vmatpush1.msra.mxu0 0.0
    %1248 = vmatprep.subr.mxu0 0.0
    %1249 = vmatpush1.msra.mxu0 0.0
    %1250 = vmatprep.subr.mxu0 0.0
    %1251 = vmatpush1.msra.mxu0 0.0
    %1252 = vmatprep.subr.mxu0 0.0
    %1253 = vmatpush1.msra.mxu0 0.0
    %1254 = vmatprep.subr.mxu0 0.0
    %1255 = vmatpush1.msra.mxu0 0.0
    %1256 = vmatprep.subr.mxu0 0.0
    %1257 = vmatpush1.msra.mxu0 0.0
    %1258 = vmatprep.subr.mxu0 0.0
    %1259 = vmatpush1.msra.mxu0 0.0
    %1260 = vmatprep.subr.mxu0 0.0
    %1261 = vmatpush1.msra.mxu0 0.0
    %1262 = vmatprep.subr.mxu0 0.0
    %1263 = vmatpush1.msra.mxu0 0.0
    %1264 = vmatprep.subr.mxu0 0.0
    %1265 = vmatpush1.msra.mxu0 0.0
    %1266 = vmatprep.subr.mxu0 0.0
    %1267 = vmatpush1.msra.mxu0 0.0
    %1268 = vmatprep.subr.mxu0 0.0
    %1269 = vmatpush1.msra.mxu0 0.0
    %1270 = vmatprep.subr.mxu0 0.0
    %1271 = vmatpush1.msra.mxu0 0.0
    %1272 = vmatprep.subr.mxu0 0.0
    %1273 = vmatpush1.msra.mxu0 0.0
    %1274 = vmatprep.subr.mxu0 0.0
    %1275 = vmatpush1.msra.mxu0 0.0
    %1276 = vmatprep.subr.mxu0 0.0
    %1277 = vmatpush1.msra.mxu0 0.0
    %1278 = vmatprep.subr.mxu0 0.0
    %1279 = vmatpush1.msra.mxu0 0.0
    %1280 = vmatprep.subr.mxu0 0.0
    %1281 = vmatpush1.msra.mxu0 0.0
    %1282 = vmatprep.subr.mxu0 0.0
    %1283 = vmatpush1.msra.mxu0 0.0
    %1284 = vmatprep.subr.mxu0 0.0
    %1285 = vmatpush1.msra.mxu0 0.0
    %1286 = vmatprep.subr.mxu0 0.0
    %1287 = vmatpush1.msra.mxu0 0.0
    %1288 = vmatprep.subr.mxu0 0.0
    %1289 = vmatpush1.msra.mxu0 0.0
    %1290 = vmatprep.subr.mxu0 0.0
    %1291 = vmatpush1.msra.mxu0 0.0
    %1292 = vmatprep.mubr.f32.mxu0 0.0
    %1293 = vmatmul.mubr.f32.gmra.mrb[0].mxu0 %v1226
    %v1294 = vpop.f32.mrb[0].mxu0
    %v1295 = vadd.f32 %v1222, %v1294
    %v1296 = vpop.f32.mrb[0].mxu0
    %1297 = vdwg.mxu0
    %v1298 = vmax.f32 %v1295, 0.0
    %v1299 = vld [vmem:[%s11] sm:$0xff]
    %v1300 = vld [vmem:[%s11 + $0x8] sm:$0xff]
    %v1301 = vld [vmem:[%s11 + $0x10] sm:$0xff]
    %v1302 = vld [vmem:[%s11 + $0x18] sm:$0xff]
    %v1303 = vld [vmem:[%s12] sm:$0x1]
    %v1305 = vlaneseq
    %v1306 = vshrl.u32 %v1305, 7
    %v1307 = vsub.s32 0, %v1306
    %v1308 = vrot.slane %v1303, %v1307
    %v1311 = vsel %vm242, %v1298, 0
    %1313 = vmatprep.subr.mxu0 0.0
    %1314 = vmatpush1.msra.mxu0 %v1299
    %1315 = vmatprep.subr.mxu0 0.0
    %1316 = vmatpush1.msra.mxu0 %v1300
    %1317 = vmatprep.subr.mxu0 0.0
    %1318 = vmatpush1.msra.mxu0 %v1301
    %1319 = vmatprep.subr.mxu0 0.0
    %1320 = vmatpush1.msra.mxu0 %v1302
    %1321 = vmatprep.subr.mxu0 0.0
    %1322 = vmatpush1.msra.mxu0 0.0
    %1323 = vmatprep.subr.mxu0 0.0
    %1324 = vmatpush1.msra.mxu0 0.0
    %1325 = vmatprep.subr.mxu0 0.0
    %1326 = vmatpush1.msra.mxu0 0.0
    %1327 = vmatprep.subr.mxu0 0.0
    %1328 = vmatpush1.msra.mxu0 0.0
    %1329 = vmatprep.subr.mxu0 0.0
    %1330 = vmatpush1.msra.mxu0 0.0
    %1331 = vmatprep.subr.mxu0 0.0
    %1332 = vmatpush1.msra.mxu0 0.0
    %1333 = vmatprep.subr.mxu0 0.0
    %1334 = vmatpush1.msra.mxu0 0.0
    %1335 = vmatprep.subr.mxu0 0.0
    %1336 = vmatpush1.msra.mxu0 0.0
    %1337 = vmatprep.subr.mxu0 0.0
    %1338 = vmatpush1.msra.mxu0 0.0
    %1339 = vmatprep.subr.mxu0 0.0
    %1340 = vmatpush1.msra.mxu0 0.0
    %1341 = vmatprep.subr.mxu0 0.0
    %1342 = vmatpush1.msra.mxu0 0.0
    %1343 = vmatprep.subr.mxu0 0.0
    %1344 = vmatpush1.msra.mxu0 0.0
    %1345 = vmatprep.subr.mxu0 0.0
    %1346 = vmatpush1.msra.mxu0 0.0
    %1347 = vmatprep.subr.mxu0 0.0
    %1348 = vmatpush1.msra.mxu0 0.0
    %1349 = vmatprep.subr.mxu0 0.0
    %1350 = vmatpush1.msra.mxu0 0.0
    %1351 = vmatprep.subr.mxu0 0.0
    %1352 = vmatpush1.msra.mxu0 0.0
    %1353 = vmatprep.subr.mxu0 0.0
    %1354 = vmatpush1.msra.mxu0 0.0
    %1355 = vmatprep.subr.mxu0 0.0
    %1356 = vmatpush1.msra.mxu0 0.0
    %1357 = vmatprep.subr.mxu0 0.0
    %1358 = vmatpush1.msra.mxu0 0.0
    %1359 = vmatprep.subr.mxu0 0.0
    %1360 = vmatpush1.msra.mxu0 0.0
    %1361 = vmatprep.subr.mxu0 0.0
    %1362 = vmatpush1.msra.mxu0 0.0
    %1363 = vmatprep.subr.mxu0 0.0
    %1364 = vmatpush1.msra.mxu0 0.0
    %1365 = vmatprep.subr.mxu0 0.0
    %1366 = vmatpush1.msra.mxu0 0.0
    %1367 = vmatprep.subr.mxu0 0.0
    %1368 = vmatpush1.msra.mxu0 0.0
    %1369 = vmatprep.subr.mxu0 0.0
    %1370 = vmatpush1.msra.mxu0 0.0
    %1371 = vmatprep.subr.mxu0 0.0
    %1372 = vmatpush1.msra.mxu0 0.0
    %1373 = vmatprep.subr.mxu0 0.0
    %1374 = vmatpush1.msra.mxu0 0.0
    %1375 = vmatprep.subr.mxu0 0.0
    %1376 = vmatpush1.msra.mxu0 0.0
    %1377 = vmatprep.mubr.f32.mxu0 0.0
    %1378 = vmatmul.mubr.f32.gmra.mrb[0].mxu0 %v1311
    %v1379 = vpop.f32.mrb[0].mxu0
    %v1380 = vadd.f32 %v1308, %v1379
    %v1381 = vpop.f32.mrb[0].mxu0
    %1382 = vdwg.mxu0
    %v1383 = vmax.f32 %v1380, 0.0
    %v1384 = vld [vmem:[%s13] sm:$0xff]
    %v1385 = vld [vmem:[%s13 + $0x8] sm:$0xff]
    %v1386 = vld [vmem:[%s13 + $0x10] sm:$0xff]
    %v1387 = vld [vmem:[%s13 + $0x18] sm:$0xff]
    %v1388 = vld [vmem:[%s14] sm:$0x1]
    %v1390 = vlaneseq
    %v1391 = vshrl.u32 %v1390, 7
    %v1392 = vsub.s32 0, %v1391
    %v1393 = vrot.slane %v1388, %v1392
    %v1396 = vsel %vm242, %v1383, 0
    %1398 = vmatprep.subr.mxu0 0.0
    %1399 = vmatpush1.msra.mxu0 %v1384
    %1400 = vmatprep.subr.mxu0 0.0
    %1401 = vmatpush1.msra.mxu0 %v1385
    %1402 = vmatprep.subr.mxu0 0.0
    %1403 = vmatpush1.msra.mxu0 %v1386
    %1404 = vmatprep.subr.mxu0 0.0
    %1405 = vmatpush1.msra.mxu0 %v1387
    %1406 = vmatprep.subr.mxu0 0.0
    %1407 = vmatpush1.msra.mxu0 0.0
    %1408 = vmatprep.subr.mxu0 0.0
    %1409 = vmatpush1.msra.mxu0 0.0
    %1410 = vmatprep.subr.mxu0 0.0
    %1411 = vmatpush1.msra.mxu0 0.0
    %1412 = vmatprep.subr.mxu0 0.0
    %1413 = vmatpush1.msra.mxu0 0.0
    %1414 = vmatprep.subr.mxu0 0.0
    %1415 = vmatpush1.msra.mxu0 0.0
    %1416 = vmatprep.subr.mxu0 0.0
    %1417 = vmatpush1.msra.mxu0 0.0
    %1418 = vmatprep.subr.mxu0 0.0
    %1419 = vmatpush1.msra.mxu0 0.0
    %1420 = vmatprep.subr.mxu0 0.0
    %1421 = vmatpush1.msra.mxu0 0.0
    %1422 = vmatprep.subr.mxu0 0.0
    %1423 = vmatpush1.msra.mxu0 0.0
    %1424 = vmatprep.subr.mxu0 0.0
    %1425 = vmatpush1.msra.mxu0 0.0
    %1426 = vmatprep.subr.mxu0 0.0
    %1427 = vmatpush1.msra.mxu0 0.0
    %1428 = vmatprep.subr.mxu0 0.0
    %1429 = vmatpush1.msra.mxu0 0.0
    %1430 = vmatprep.subr.mxu0 0.0
    %1431 = vmatpush1.msra.mxu0 0.0
    %1432 = vmatprep.subr.mxu0 0.0
    %1433 = vmatpush1.msra.mxu0 0.0
    %1434 = vmatprep.subr.mxu0 0.0
    %1435 = vmatpush1.msra.mxu0 0.0
    %1436 = vmatprep.subr.mxu0 0.0
    %1437 = vmatpush1.msra.mxu0 0.0
    %1438 = vmatprep.subr.mxu0 0.0
    %1439 = vmatpush1.msra.mxu0 0.0
    %1440 = vmatprep.subr.mxu0 0.0
    %1441 = vmatpush1.msra.mxu0 0.0
    %1442 = vmatprep.subr.mxu0 0.0
    %1443 = vmatpush1.msra.mxu0 0.0
    %1444 = vmatprep.subr.mxu0 0.0
    %1445 = vmatpush1.msra.mxu0 0.0
    %1446 = vmatprep.subr.mxu0 0.0
    %1447 = vmatpush1.msra.mxu0 0.0
    %1448 = vmatprep.subr.mxu0 0.0
    %1449 = vmatpush1.msra.mxu0 0.0
    %1450 = vmatprep.subr.mxu0 0.0
    %1451 = vmatpush1.msra.mxu0 0.0
    %1452 = vmatprep.subr.mxu0 0.0
    %1453 = vmatpush1.msra.mxu0 0.0
    %1454 = vmatprep.subr.mxu0 0.0
    %1455 = vmatpush1.msra.mxu0 0.0
    %1456 = vmatprep.subr.mxu0 0.0
    %1457 = vmatpush1.msra.mxu0 0.0
    %1458 = vmatprep.subr.mxu0 0.0
    %1459 = vmatpush1.msra.mxu0 0.0
    %1460 = vmatprep.subr.mxu0 0.0
    %1461 = vmatpush1.msra.mxu0 0.0
    %1462 = vmatprep.mubr.f32.mxu0 0.0
    %1463 = vmatmul.mubr.f32.gmra.mrb[0].mxu0 %v1396
    %v1464 = vpop.f32.mrb[0].mxu0
    %v1465 = vadd.f32 %v1393, %v1464
    %v1466 = vpop.f32.mrb[0].mxu0
    %1467 = vdwg.mxu0
    %vm1468 = vcmp.ge.f32.partialorder %v1465, 0.0
    %v1469 = vmul.f32 %v1465, 0.01
    %v1470 = vsel %vm1468, %v1465, %v1469
    %vm1471 = vcmask 25600
    %1472 = vst.msk [vmem:[#allocation2] sm:$0x3] %vm1471, %v1470
    // Predicated region
    $region69: #{gnn_forward.1} parent=1 // pred_check
      _
    $region70: #{gnn_forward.1} parent=1 // pred_check_branch
      %1474 = sbr.rel (0) target = $region72
    $region71: #{gnn_forward.1} parent=1 // pred_region
      %s1476 = ssub.s32 32, 32
      %1477 = vsyncadd [#allocation3], %s1476
      %s1479 = sshll.u32 [#allocation2], 4
      %s1480 = int_to_ptr.vmem [resolvable:$true] %s1479
      %1482 = dma.vmem_to_hbm [thread:$0]  %s1480, 32, %s15, [#allocation3]
    $region72: #{gnn_forward.1} parent=1 // pred_fallthru
      _
    // Predicated region
    $region73: #{gnn_forward.1} parent=1 // pred_check
      _
    $region74: #{gnn_forward.1} parent=1 // pred_check_branch
      %1484 = sbr.rel (0) target = $region76
    $region75: #{gnn_forward.1} parent=1 // pred_region
      %1485 = dma.done [#allocation3], 32
    $region76: #{gnn_forward.1} parent=1 // pred_fallthru
      _
    %1486 = vsyncpa [#allocation3], 1

</llo_original>
